<compile_context>
chip_gen: v5e
topology: v5e:2x2
jax: 0.10.0
libtpu: 0.0.40
codegen_flags: <defaults>
</compile_context>

<pallas_src>
import functools

import numpy as np

import jax
import jax.numpy as jnp
from jax import lax
from jax.experimental import pallas as pl
from jax.experimental.pallas import tpu as pltpu


# ----------------------------------------------------------------------------
# One-time parameter re-layout (plain JAX, run once outside the forward path)
# ----------------------------------------------------------------------------
def _banded_conv_weight(wc, w_in, w_out, col_pad=0):
    """wc: (Cout, Cin, 3, 3) cross-correlation weight.

    Returns B of shape (3, w_in*Cin, w_out*Cout) such that a 3x3 conv of a
    channels-last slab X (rows, w_in*Cin), whose columns are *conceptually*
    zero-padded by `col_pad` on each side, is
        out[r] = sum_dy X[r+dy, :] @ B[dy]          # (rows-2, w_out*Cout)
    Row padding (if any) must already be present in X itself.
    """
    c_out, c_in, k, _ = wc.shape
    w = np.arange(w_in)[None, :, None]
    wo = np.arange(w_out)[None, None, :]
    dx = np.arange(k)[:, None, None]
    sel = (w + col_pad == wo + dx).astype(np.float32)            # (k, w_in, w_out)
    b = jnp.einsum("oidx,xwv->dwivo", wc.astype(jnp.float32), jnp.asarray(sel))
    return b.reshape(k, w_in * c_in, w_out * c_out)


def _chw_rows_to_hwc(m, c, h, w):
    """Rows of m are indexed in torch CHW-flatten order (c*h*w + y*w + x);
    permute them to the kernel's (y, x*c + c) slab order."""
    t = m.reshape((c, h, w) + m.shape[1:])
    t = jnp.moveaxis(t, 0, 2)                                    # (h, w, c, ...)
    return t.reshape((h, w * c) + m.shape[1:])


def preprocess_params(params, C, P, L):
    """Re-layout PyTorch-style parameters into kernel-ready f32 matrices."""
    f32 = jnp.float32
    H1, H2 = P - 2, P - 4

    w1 = params["w1"].astype(f32)                                # (16, C, 3, 3)
    w2 = params["w2"].astype(f32)                                # (4, 16, 3, 3)
    # ConvTranspose2d(k=3, s=1) == valid conv of the 2-padded input with the
    # spatially flipped, (ci, co)-swapped kernel.
    wc5 = jnp.transpose(params["w5"].astype(f32)[:, :, ::-1, ::-1], (1, 0, 2, 3))
    wc6 = jnp.transpose(params["w6"].astype(f32)[:, :, ::-1, ::-1], (1, 0, 2, 3))

    # fc31 | fc32 fused into one flat (hidden, 2L) matmul, rows permuted to the
    # kernel's conv2 output slab order (y, x*4 + c).
    w3 = jnp.concatenate([params["w31"].astype(f32).T,
                          params["w32"].astype(f32).T], axis=1)  # (hidden, 2L)
    w3f = _chw_rows_to_hwc(w3, 4, H2, H2).reshape(H2 * H2 * 4, 2 * L)
    b3 = jnp.concatenate([params["b31"], params["b32"]]).astype(f32).reshape(1, 2 * L)

    # fc41 in "block diagonal" form so its output lands directly as (H2, H2*4):
    #   h41_2d = ((z @ tmat) * bdmask) @ w41bd + b41_2d
    w41p = _chw_rows_to_hwc(params["w41"].astype(f32), 4, H2, H2)   # (H2, H2*4, L)
    w41bd = jnp.transpose(w41p, (0, 2, 1)).reshape(H2 * L, H2 * 4)  # (H2*L, H2*4)
    b41_2d = _chw_rows_to_hwc(params["b41"].astype(f32).reshape(-1, 1),
                              4, H2, H2).reshape(H2, H2 * 4)
    tmat = jnp.tile(jnp.eye(L, dtype=f32), (1, H2))                 # (L, H2*L)
    bdmask = jnp.asarray(np.kron(np.eye(H2, dtype=np.float32),
                                 np.ones((1, L), np.float32)))      # (H2, H2*L)

    return {
        "w1b": _banded_conv_weight(w1, P, H1, 0),
        "b1t": jnp.tile(params["b1"].astype(f32), H1).reshape(1, H1 * 16),
        "w2b": _banded_conv_weight(w2, H1, H2, 0),
        "b2t": jnp.tile(params["b2"].astype(f32), H2).reshape(1, H2 * 4),
        "w3f": w3f, "b3": b3,
        "tmat": tmat, "bdmask": bdmask, "w41bd": w41bd, "b41_2d": b41_2d,
        # Decoder: column (lane) padding of the pad-2 "full" conv folded into B.
        "w5b": _banded_conv_weight(wc5, H2, H1, 2),
        "b5t": jnp.tile(params["b5"].astype(f32), H1).reshape(1, H1 * 16),
        "w6b": _banded_conv_weight(wc6, H1, P, 2),
        "b6t": jnp.tile(params["b6"].astype(f32), P).reshape(1, P * C),
    }


# ----------------------------------------------------------------------------
# The fused Pallas kernel: whole VAE forward, all intermediates in VMEM/vregs
# ----------------------------------------------------------------------------
def _vae_fused_kernel(x_ref, eps_ref,
                      w1_ref, b1_ref, w2_ref, b2_ref,
                      w3_ref, b3_ref,
                      t_ref, mbd_ref, w41_ref, b41_ref,
                      w5_ref, b5_ref, w6_ref, b6_ref,
                      recon_ref, mlv_ref,
                      flat_ref, pad5_ref, pad6_ref, *, P, L):
    f32 = jnp.float32
    H1 = P - 2                       # conv1 / convT5 output height/width
    H2 = P - 4                       # conv2 output height/width
    DW = H2 * 4                      # latent-path row width (conv2 has 4 channels)

    def conv3(x, w_ref, b_ref, rows):
        # x: (rows+2, K) channels-last slab; w_ref: (3, K, N); out: (rows, N).
        return (jnp.dot(x[0:rows, :], w_ref[0], preferred_element_type=f32)
                + jnp.dot(x[1:rows + 1, :], w_ref[1], preferred_element_type=f32)
                + jnp.dot(x[2:rows + 2, :], w_ref[2], preferred_element_type=f32)
                + b_ref[...])

    # ---------------- encoder ----------------
    x = x_ref[...]                                                  # (P, P*C)
    h1 = jnp.maximum(conv3(x, w1_ref, b1_ref, H1), 0.0)             # (H1, H1*16)
    h2 = jnp.maximum(conv3(h1, w2_ref, b2_ref, H2), 0.0)            # (H2, H2*4)

    # ---------------- fc31|fc32 as ONE matmul + reparameterize ----------------
    for h in range(H2):                                             # (H2,DW)->(1,H2*DW)
        flat_ref[0:1, h * DW:(h + 1) * DW] = h2[h:h + 1, :]
    ml = jnp.dot(flat_ref[...], w3_ref[...],
                 preferred_element_type=f32) + b3_ref[...]          # (1, 2L)
    mlv_ref[...] = ml
    mu = ml[:, :L]
    logvar = ml[:, L:]
    z = mu + eps_ref[...] * jnp.exp(0.5 * logvar)                   # (1, L)

    # ---------------- fc41 straight into the (H2, H2*4) decoder layout --------
    zt = jnp.dot(z, t_ref[...], preferred_element_type=f32)         # (1, H2*L): z tiled
    zbd = zt * mbd_ref[...]                                         # (H2, H2*L) block-diag
    h41 = jnp.dot(zbd, w41_ref[...],
                  preferred_element_type=f32) + b41_ref[...]        # (H2, H2*4)

    # ---------------- convT5 (column padding folded into w5b) + ReLU ----------
    pad5_ref[0:2, :] = jnp.zeros((2, DW), f32)
    pad5_ref[2 + H2:4 + H2, :] = jnp.zeros((2, DW), f32)
    pad5_ref[2:2 + H2, :] = h41                                      # one bulk store
    h5 = jnp.maximum(conv3(pad5_ref[...], w5_ref, b5_ref, H1), 0.0)  # (H1, H1*16)

    # ---------------- convT6 + sigmoid ----------------
    pad6_ref[0:2, :] = jnp.zeros((2, H1 * 16), f32)
    pad6_ref[2 + H1:4 + H1, :] = jnp.zeros((2, H1 * 16), f32)
    pad6_ref[2:2 + H1, :] = h5                                       # one bulk store
    recon_ref[...] = jax.nn.sigmoid(conv3(pad6_ref[...], w6_ref, b6_ref, P))


def _fused_forward(kp, x_slab, eps3, C, P, L):
    N = x_slab.shape[0]
    H1, H2 = P - 2, P - 4

    def per_patch(shape):
        nd = len(shape)

        def imap(n):
            return (n,) + (0,) * (nd - 1)

        return pl.BlockSpec((None,) + tuple(shape[1:]), imap)

    def resident(arr):
        nd = arr.ndim

        def imap(n):
            return (0,) * nd

        return pl.BlockSpec(arr.shape, imap)

    weights = (kp["w1b"], kp["b1t"], kp["w2b"], kp["b2t"],
               kp["w3f"], kp["b3"],
               kp["tmat"], kp["bdmask"], kp["w41bd"], kp["b41_2d"],
               kp["w5b"], kp["b5t"], kp["w6b"], kp["b6t"])

    return pl.pallas_call(
        functools.partial(_vae_fused_kernel, P=P, L=L),
        out_shape=(jax.ShapeDtypeStruct((N, P, P * C), jnp.float32),
                   jax.ShapeDtypeStruct((N, 1, 2 * L), jnp.float32)),
        grid=(N,),
        in_specs=[per_patch(x_slab.shape), per_patch(eps3.shape)]
                 + [resident(w) for w in weights],
        out_specs=(per_patch((N, P, P * C)), per_patch((N, 1, 2 * L))),
        scratch_shapes=[pltpu.VMEM((1, H2 * H2 * 4), jnp.float32),    # h2 flat
                        pltpu.VMEM((H2 + 4, H2 * 4), jnp.float32),    # pad5 (rows only)
                        pltpu.VMEM((H1 + 4, H1 * 16), jnp.float32)],  # pad6 (rows only)
        compiler_params=pltpu.CompilerParams(
            dimension_semantics=("parallel",)),
    )(x_slab, eps3, *weights)


@functools.partial(jax.jit, static_argnames=("C", "P", "L"))
def toad_level_vae_forward(kparams, x_nchw, eps, *, C, P, L):
    # NCHW -> channels-last (N, P, P*C) slabs for the kernel (plain XLA glue).
    N = x_nchw.shape[0]
    x_slab = jnp.transpose(x_nchw.astype(jnp.float32), (0, 2, 3, 1)).reshape(N, P, P * C)
    eps3 = eps.astype(jnp.float32).reshape(N, 1, L)
    recon_slab, mlv = _fused_forward(kparams, x_slab, eps3, C, P, L)
    recon = jnp.transpose(recon_slab.reshape(N, P, P, C), (0, 3, 1, 2))
    return recon, mlv[:, 0, :L], mlv[:, 0, L:]


# ----------------------------------------------------------------------------
# Deterministic parameter init (shapes follow the PyTorch module __init__)
# ----------------------------------------------------------------------------
def init_params(key, C, patch_size, latent_dims):
    hidden = 4 * (patch_size - 4) * (patch_size - 4)
    keys = jax.random.split(key, 14)
    s = 0.05

    def n(k, shape):
        return s * jax.random.normal(k, shape, dtype=jnp.float32)

    return {
        "w1": n(keys[0], (16, C, 3, 3)),   "b1": n(keys[1], (16,)),
        "w2": n(keys[2], (4, 16, 3, 3)),   "b2": n(keys[3], (4,)),
        "w31": n(keys[4], (latent_dims, hidden)), "b31": n(keys[5], (latent_dims,)),
        "w32": n(keys[6], (latent_dims, hidden)), "b32": n(keys[7], (latent_dims,)),
        "w41": n(keys[8], (hidden, latent_dims)), "b41": n(keys[9], (hidden,)),
        "w5": n(keys[10], (4, 16, 3, 3)),  "b5": n(keys[11], (16,)),
        "w6": n(keys[12], (16, C, 3, 3)),  "b6": n(keys[13], (C,)),
    }
    # TODO(synk): fc42 exists in the PyTorch __init__ but is unused in forward(); omitted.


# ----------------------------------------------------------------------------
# Pure-JAX reference of ToadLevelVAE.forward (for numerical parity check)
# ----------------------------------------------------------------------------
def _reference_forward(params, x_nchw, eps, P):
    H2 = P - 4
    dn = ("NCHW", "OIHW", "NCHW")
    hp = lax.Precision.HIGHEST
    x = x_nchw.astype(jnp.float32)
    h1 = jax.nn.relu(lax.conv_general_dilated(x, params["w1"], (1, 1), "VALID",
                                              dimension_numbers=dn, precision=hp)
                     + params["b1"].reshape(1, -1, 1, 1))
    h2 = jax.nn.relu(lax.conv_general_dilated(h1, params["w2"], (1, 1), "VALID",
                                              dimension_numbers=dn, precision=hp)
                     + params["b2"].reshape(1, -1, 1, 1))
    h2f = h2.reshape(h2.shape[0], -1)
    mu = jnp.dot(h2f, params["w31"].T, precision=hp) + params["b31"]
    logvar = jnp.dot(h2f, params["w32"].T, precision=hp) + params["b32"]
    z = mu + eps * jnp.exp(0.5 * logvar)
    h41 = (jnp.dot(z, params["w41"].T, precision=hp) + params["b41"]).reshape(-1, 4, H2, H2)
    wc5 = jnp.transpose(params["w5"][:, :, ::-1, ::-1], (1, 0, 2, 3))
    h5 = jax.nn.relu(lax.conv_general_dilated(h41, wc5, (1, 1), [(2, 2), (2, 2)],
                                              dimension_numbers=dn, precision=hp)
                     + params["b5"].reshape(1, -1, 1, 1))
    wc6 = jnp.transpose(params["w6"][:, :, ::-1, ::-1], (1, 0, 2, 3))
    recon = jax.nn.sigmoid(lax.conv_general_dilated(h5, wc6, (1, 1), [(2, 2), (2, 2)],
                                                    dimension_numbers=dn, precision=hp)
                           + params["b6"].reshape(1, -1, 1, 1))
    return recon, mu, logvar


if __name__ == "__main__":
    C, P, LATENT, N = 4, 16, 32, 2

    root = jax.random.PRNGKey(0)
    k_params, k_x, k_eps = jax.random.split(root, 3)

    params = init_params(k_params, C, P, LATENT)
    kparams = preprocess_params(params, C, P, LATENT)     # one-time weight re-layout
    x = jax.random.normal(k_x, (N, C, P, P), dtype=jnp.float32)      # NCHW patches
    eps = jax.random.normal(k_eps, (N, LATENT), dtype=jnp.float32)   # external randn_like(std)

    recon, mu, logvar = toad_level_vae_forward(kparams, x, eps, C=C, P=P, L=LATENT)
    jax.block_until_ready((recon, mu, logvar))

    assert recon.shape == (N, C, P, P)
    assert mu.shape == (N, LATENT) and logvar.shape == (N, LATENT)

    # Numerical parity vs. a high-precision pure-JAX mirror of the PyTorch forward.
    # Tolerance covers possible bf16 MXU passes of the in-kernel f32 matmuls at
    # default precision (observed ~1e-6 when full f32 passes are used); any
    # layout/permutation bug would produce O(1e-1) errors and still be caught.
    ref_recon, ref_mu, ref_logvar = _reference_forward(params, x, eps, P)
    np.testing.assert_allclose(np.asarray(recon), np.asarray(ref_recon), atol=3e-3, rtol=0)
    np.testing.assert_allclose(np.asarray(mu), np.asarray(ref_mu), atol=3e-3, rtol=0)
    np.testing.assert_allclose(np.asarray(logvar), np.asarray(ref_logvar), atol=3e-3, rtol=0)

    print("KERNEL_OK")
</pallas_src>

<mosaic_0001>
module attributes {stable_mosaic.version = 11 : i64} {
  func.func @_vae_fused_kernel(%arg0: i32, %arg1: memref<1x16x64xf32, #tpu.memory_space<vmem>>, %arg2: memref<1x1x32xf32, #tpu.memory_space<vmem>>, %arg3: memref<3x64x224xf32, #tpu.memory_space<vmem>>, %arg4: memref<1x224xf32, #tpu.memory_space<vmem>>, %arg5: memref<3x224x48xf32, #tpu.memory_space<vmem>>, %arg6: memref<1x48xf32, #tpu.memory_space<vmem>>, %arg7: memref<576x64xf32, #tpu.memory_space<vmem>>, %arg8: memref<1x64xf32, #tpu.memory_space<vmem>>, %arg9: memref<32x384xf32, #tpu.memory_space<vmem>>, %arg10: memref<12x384xf32, #tpu.memory_space<vmem>>, %arg11: memref<384x48xf32, #tpu.memory_space<vmem>>, %arg12: memref<12x48xf32, #tpu.memory_space<vmem>>, %arg13: memref<3x48x224xf32, #tpu.memory_space<vmem>>, %arg14: memref<1x224xf32, #tpu.memory_space<vmem>>, %arg15: memref<3x224x64xf32, #tpu.memory_space<vmem>>, %arg16: memref<1x64xf32, #tpu.memory_space<vmem>>, %arg17: memref<1x16x64xf32, #tpu.memory_space<vmem>>, %arg18: memref<1x1x64xf32, #tpu.memory_space<vmem>>, %arg19: memref<1x576xf32, #tpu.memory_space<vmem>>, %arg20: memref<16x48xf32, #tpu.memory_space<vmem>>, %arg21: memref<18x224xf32, #tpu.memory_space<vmem>>) attributes {dimension_semantics = [#tpu.dimension_semantics<parallel>], iteration_bounds = array<i64: 2>, scalar_prefetch = 0 : i64, scratch_operands = 3 : i64, tpu.core_type = #tpu.core_type<tc>, window_params = [{transform_indices = @transform_0, window_bounds = array<i64: 1, 16, 64>}, {transform_indices = @transform_1, window_bounds = array<i64: 1, 1, 32>}, {pipeline_mode = #tpu.pipeline_mode<synchronous>, transform_indices = @transform_2, window_bounds = array<i64: 3, 64, 224>}, {pipeline_mode = #tpu.pipeline_mode<synchronous>, transform_indices = @transform_3, window_bounds = array<i64: 1, 224>}, {pipeline_mode = #tpu.pipeline_mode<synchronous>, transform_indices = @transform_4, window_bounds = array<i64: 3, 224, 48>}, {pipeline_mode = #tpu.pipeline_mode<synchronous>, transform_indices = @transform_5, window_bounds = array<i64: 1, 48>}, {pipeline_mode = #tpu.pipeline_mode<synchronous>, transform_indices = @transform_6, window_bounds = array<i64: 576, 64>}, {pipeline_mode = #tpu.pipeline_mode<synchronous>, transform_indices = @transform_7, window_bounds = array<i64: 1, 64>}, {pipeline_mode = #tpu.pipeline_mode<synchronous>, transform_indices = @transform_8, window_bounds = array<i64: 32, 384>}, {pipeline_mode = #tpu.pipeline_mode<synchronous>, transform_indices = @transform_9, window_bounds = array<i64: 12, 384>}, {pipeline_mode = #tpu.pipeline_mode<synchronous>, transform_indices = @transform_10, window_bounds = array<i64: 384, 48>}, {pipeline_mode = #tpu.pipeline_mode<synchronous>, transform_indices = @transform_11, window_bounds = array<i64: 12, 48>}, {pipeline_mode = #tpu.pipeline_mode<synchronous>, transform_indices = @transform_12, window_bounds = array<i64: 3, 48, 224>}, {pipeline_mode = #tpu.pipeline_mode<synchronous>, transform_indices = @transform_13, window_bounds = array<i64: 1, 224>}, {pipeline_mode = #tpu.pipeline_mode<synchronous>, transform_indices = @transform_14, window_bounds = array<i64: 3, 224, 64>}, {pipeline_mode = #tpu.pipeline_mode<synchronous>, transform_indices = @transform_15, window_bounds = array<i64: 1, 64>}, {transform_indices = @transform_16, window_bounds = array<i64: 1, 16, 64>}, {transform_indices = @transform_17, window_bounds = array<i64: 1, 1, 64>}]} {
    %c0 = arith.constant 0 : index
    %c0_0 = arith.constant 0 : index
    %c0_1 = arith.constant 0 : index
    %0 = vector.load %arg1[%c0, %c0_0, %c0_1] : memref<1x16x64xf32, #tpu.memory_space<vmem>>, vector<1x16x64xf32>
    %1 = vector.shape_cast %0 : vector<1x16x64xf32> to vector<16x64xf32>
    %2 = vector.extract_strided_slice %1 {offsets = [0, 0], sizes = [14, 64], strides = [1, 1]} : vector<16x64xf32> to vector<14x64xf32>
    %c0_2 = arith.constant 0 : index
    %c0_3 = arith.constant 0 : index
    %c0_4 = arith.constant 0 : index
    %3 = vector.load %arg3[%c0_2, %c0_3, %c0_4] : memref<3x64x224xf32, #tpu.memory_space<vmem>>, vector<1x64x224xf32>
    %4 = vector.shape_cast %3 : vector<1x64x224xf32> to vector<64x224xf32>
    %cst = arith.constant dense<0.000000e+00> : vector<14x224xf32>
    %5 = tpu.matmul %2, %4, %cst {dimension_numbers = #tpu.dot_dimension_numbers<[1], [0], [0], [1], [0, 0, 1, 1], [], []>} : vector<14x64xf32>, vector<64x224xf32>, vector<14x224xf32> -> vector<14x224xf32>
    %6 = vector.extract_strided_slice %1 {offsets = [1, 0], sizes = [14, 64], strides = [1, 1]} : vector<16x64xf32> to vector<14x64xf32>
    %c1 = arith.constant 1 : index
    %c0_5 = arith.constant 0 : index
    %c0_6 = arith.constant 0 : index
    %7 = vector.load %arg3[%c1, %c0_5, %c0_6] : memref<3x64x224xf32, #tpu.memory_space<vmem>>, vector<1x64x224xf32>
    %8 = vector.shape_cast %7 : vector<1x64x224xf32> to vector<64x224xf32>
    %cst_7 = arith.constant dense<0.000000e+00> : vector<14x224xf32>
    %9 = tpu.matmul %6, %8, %cst_7 {dimension_numbers = #tpu.dot_dimension_numbers<[1], [0], [0], [1], [0, 0, 1, 1], [], []>} : vector<14x64xf32>, vector<64x224xf32>, vector<14x224xf32> -> vector<14x224xf32>
    %10 = arith.addf %5, %9 : vector<14x224xf32>
    %11 = vector.extract_strided_slice %1 {offsets = [2, 0], sizes = [14, 64], strides = [1, 1]} : vector<16x64xf32> to vector<14x64xf32>
    %c2 = arith.constant 2 : index
    %c0_8 = arith.constant 0 : index
    %c0_9 = arith.constant 0 : index
    %12 = vector.load %arg3[%c2, %c0_8, %c0_9] : memref<3x64x224xf32, #tpu.memory_space<vmem>>, vector<1x64x224xf32>
    %13 = vector.shape_cast %12 : vector<1x64x224xf32> to vector<64x224xf32>
    %cst_10 = arith.constant dense<0.000000e+00> : vector<14x224xf32>
    %14 = tpu.matmul %11, %13, %cst_10 {dimension_numbers = #tpu.dot_dimension_numbers<[1], [0], [0], [1], [0, 0, 1, 1], [], []>} : vector<14x64xf32>, vector<64x224xf32>, vector<14x224xf32> -> vector<14x224xf32>
    %15 = arith.addf %10, %14 : vector<14x224xf32>
    %c0_11 = arith.constant 0 : index
    %c0_12 = arith.constant 0 : index
    %16 = vector.load %arg4[%c0_11, %c0_12] : memref<1x224xf32, #tpu.memory_space<vmem>>, vector<1x224xf32>
    %17 = vector.broadcast %16 : vector<1x224xf32> to vector<14x224xf32>
    %18 = arith.addf %15, %17 : vector<14x224xf32>
    %cst_13 = arith.constant 0.000000e+00 : f32
    %19 = vector.broadcast %cst_13 : f32 to vector<14x224xf32>
    %20 = arith.maximumf %18, %19 : vector<14x224xf32>
    %21 = vector.extract_strided_slice %20 {offsets = [0, 0], sizes = [12, 224], strides = [1, 1]} : vector<14x224xf32> to vector<12x224xf32>
    %c0_14 = arith.constant 0 : index
    %c0_15 = arith.constant 0 : index
    %c0_16 = arith.constant 0 : index
    %22 = vector.load %arg5[%c0_14, %c0_15, %c0_16] : memref<3x224x48xf32, #tpu.memory_space<vmem>>, vector<1x224x48xf32>
    %23 = vector.shape_cast %22 : vector<1x224x48xf32> to vector<224x48xf32>
    %cst_17 = arith.constant dense<0.000000e+00> : vector<12x48xf32>
    %24 = tpu.matmul %21, %23, %cst_17 {dimension_numbers = #tpu.dot_dimension_numbers<[1], [0], [0], [1], [0, 0, 1, 1], [], []>} : vector<12x224xf32>, vector<224x48xf32>, vector<12x48xf32> -> vector<12x48xf32>
    %25 = vector.extract_strided_slice %20 {offsets = [1, 0], sizes = [12, 224], strides = [1, 1]} : vector<14x224xf32> to vector<12x224xf32>
    %c1_18 = arith.constant 1 : index
    %c0_19 = arith.constant 0 : index
    %c0_20 = arith.constant 0 : index
    %26 = vector.load %arg5[%c1_18, %c0_19, %c0_20] : memref<3x224x48xf32, #tpu.memory_space<vmem>>, vector<1x224x48xf32>
    %27 = vector.shape_cast %26 : vector<1x224x48xf32> to vector<224x48xf32>
    %cst_21 = arith.constant dense<0.000000e+00> : vector<12x48xf32>
    %28 = tpu.matmul %25, %27, %cst_21 {dimension_numbers = #tpu.dot_dimension_numbers<[1], [0], [0], [1], [0, 0, 1, 1], [], []>} : vector<12x224xf32>, vector<224x48xf32>, vector<12x48xf32> -> vector<12x48xf32>
    %29 = arith.addf %24, %28 : vector<12x48xf32>
    %30 = vector.extract_strided_slice %20 {offsets = [2, 0], sizes = [12, 224], strides = [1, 1]} : vector<14x224xf32> to vector<12x224xf32>
    %c2_22 = arith.constant 2 : index
    %c0_23 = arith.constant 0 : index
    %c0_24 = arith.constant 0 : index
    %31 = vector.load %arg5[%c2_22, %c0_23, %c0_24] : memref<3x224x48xf32, #tpu.memory_space<vmem>>, vector<1x224x48xf32>
    %32 = vector.shape_cast %31 : vector<1x224x48xf32> to vector<224x48xf32>
    %cst_25 = arith.constant dense<0.000000e+00> : vector<12x48xf32>
    %33 = tpu.matmul %30, %32, %cst_25 {dimension_numbers = #tpu.dot_dimension_numbers<[1], [0], [0], [1], [0, 0, 1, 1], [], []>} : vector<12x224xf32>, vector<224x48xf32>, vector<12x48xf32> -> vector<12x48xf32>
    %34 = arith.addf %29, %33 : vector<12x48xf32>
    %c0_26 = arith.constant 0 : index
    %c0_27 = arith.constant 0 : index
    %35 = vector.load %arg6[%c0_26, %c0_27] : memref<1x48xf32, #tpu.memory_space<vmem>>, vector<1x48xf32>
    %36 = vector.broadcast %35 : vector<1x48xf32> to vector<12x48xf32>
    %37 = arith.addf %34, %36 : vector<12x48xf32>
    %cst_28 = arith.constant 0.000000e+00 : f32
    %38 = vector.broadcast %cst_28 : f32 to vector<12x48xf32>
    %39 = arith.maximumf %37, %38 : vector<12x48xf32>
    %40 = vector.extract_strided_slice %39 {offsets = [0, 0], sizes = [1, 48], strides = [1, 1]} : vector<12x48xf32> to vector<1x48xf32>
    %c0_29 = arith.constant 0 : index
    %c0_30 = arith.constant 0 : index
    %41 = vector.load %arg19[%c0_29, %c0_30] : memref<1x576xf32, #tpu.memory_space<vmem>>, vector<1x48xf32>
    tpu.vector_store %arg19[%c0_29, %c0_30], %40 {strides = array<i32>} : memref<1x576xf32, #tpu.memory_space<vmem>>, vector<1x48xf32>,
    %42 = vector.extract_strided_slice %39 {offsets = [1, 0], sizes = [1, 48], strides = [1, 1]} : vector<12x48xf32> to vector<1x48xf32>
    %c0_31 = arith.constant 0 : index
    %c48 = arith.constant 48 : index
    %43 = vector.load %arg19[%c0_31, %c48] : memref<1x576xf32, #tpu.memory_space<vmem>>, vector<1x48xf32>
    tpu.vector_store %arg19[%c0_31, %c48], %42 {strides = array<i32>} : memref<1x576xf32, #tpu.memory_space<vmem>>, vector<1x48xf32>,
    %44 = vector.extract_strided_slice %39 {offsets = [2, 0], sizes = [1, 48], strides = [1, 1]} : vector<12x48xf32> to vector<1x48xf32>
    %c0_32 = arith.constant 0 : index
    %c96 = arith.constant 96 : index
    %45 = vector.load %arg19[%c0_32, %c96] : memref<1x576xf32, #tpu.memory_space<vmem>>, vector<1x48xf32>
    tpu.vector_store %arg19[%c0_32, %c96], %44 {strides = array<i32>} : memref<1x576xf32, #tpu.memory_space<vmem>>, vector<1x48xf32>,
    %46 = vector.extract_strided_slice %39 {offsets = [3, 0], sizes = [1, 48], strides = [1, 1]} : vector<12x48xf32> to vector<1x48xf32>
    %c0_33 = arith.constant 0 : index
    %c144 = arith.constant 144 : index
    %47 = vector.load %arg19[%c0_33, %c144] : memref<1x576xf32, #tpu.memory_space<vmem>>, vector<1x48xf32>
    tpu.vector_store %arg19[%c0_33, %c144], %46 {strides = array<i32>} : memref<1x576xf32, #tpu.memory_space<vmem>>, vector<1x48xf32>,
    %48 = vector.extract_strided_slice %39 {offsets = [4, 0], sizes = [1, 48], strides = [1, 1]} : vector<12x48xf32> to vector<1x48xf32>
    %c0_34 = arith.constant 0 : index
    %c192 = arith.constant 192 : index
    %49 = vector.load %arg19[%c0_34, %c192] : memref<1x576xf32, #tpu.memory_space<vmem>>, vector<1x48xf32>
    tpu.vector_store %arg19[%c0_34, %c192], %48 {strides = array<i32>} : memref<1x576xf32, #tpu.memory_space<vmem>>, vector<1x48xf32>,
    %50 = vector.extract_strided_slice %39 {offsets = [5, 0], sizes = [1, 48], strides = [1, 1]} : vector<12x48xf32> to vector<1x48xf32>
    %c0_35 = arith.constant 0 : index
    %c240 = arith.constant 240 : index
    %51 = vector.load %arg19[%c0_35, %c240] : memref<1x576xf32, #tpu.memory_space<vmem>>, vector<1x48xf32>
    tpu.vector_store %arg19[%c0_35, %c240], %50 {strides = array<i32>} : memref<1x576xf32, #tpu.memory_space<vmem>>, vector<1x48xf32>,
    %52 = vector.extract_strided_slice %39 {offsets = [6, 0], sizes = [1, 48], strides = [1, 1]} : vector<12x48xf32> to vector<1x48xf32>
    %c0_36 = arith.constant 0 : index
    %c288 = arith.constant 288 : index
    %53 = vector.load %arg19[%c0_36, %c288] : memref<1x576xf32, #tpu.memory_space<vmem>>, vector<1x48xf32>
    tpu.vector_store %arg19[%c0_36, %c288], %52 {strides = array<i32>} : memref<1x576xf32, #tpu.memory_space<vmem>>, vector<1x48xf32>,
    %54 = vector.extract_strided_slice %39 {offsets = [7, 0], sizes = [1, 48], strides = [1, 1]} : vector<12x48xf32> to vector<1x48xf32>
    %c0_37 = arith.constant 0 : index
    %c336 = arith.constant 336 : index
    %55 = vector.load %arg19[%c0_37, %c336] : memref<1x576xf32, #tpu.memory_space<vmem>>, vector<1x48xf32>
    tpu.vector_store %arg19[%c0_37, %c336], %54 {strides = array<i32>} : memref<1x576xf32, #tpu.memory_space<vmem>>, vector<1x48xf32>,
    %56 = vector.extract_strided_slice %39 {offsets = [8, 0], sizes = [1, 48], strides = [1, 1]} : vector<12x48xf32> to vector<1x48xf32>
    %c0_38 = arith.constant 0 : index
    %c384 = arith.constant 384 : index
    %57 = vector.load %arg19[%c0_38, %c384] : memref<1x576xf32, #tpu.memory_space<vmem>>, vector<1x48xf32>
    tpu.vector_store %arg19[%c0_38, %c384], %56 {strides = array<i32>} : memref<1x576xf32, #tpu.memory_space<vmem>>, vector<1x48xf32>,
    %58 = vector.extract_strided_slice %39 {offsets = [9, 0], sizes = [1, 48], strides = [1, 1]} : vector<12x48xf32> to vector<1x48xf32>
    %c0_39 = arith.constant 0 : index
    %c432 = arith.constant 432 : index
    %59 = vector.load %arg19[%c0_39, %c432] : memref<1x576xf32, #tpu.memory_space<vmem>>, vector<1x48xf32>
    tpu.vector_store %arg19[%c0_39, %c432], %58 {strides = array<i32>} : memref<1x576xf32, #tpu.memory_space<vmem>>, vector<1x48xf32>,
    %60 = vector.extract_strided_slice %39 {offsets = [10, 0], sizes = [1, 48], strides = [1, 1]} : vector<12x48xf32> to vector<1x48xf32>
    %c0_40 = arith.constant 0 : index
    %c480 = arith.constant 480 : index
    %61 = vector.load %arg19[%c0_40, %c480] : memref<1x576xf32, #tpu.memory_space<vmem>>, vector<1x48xf32>
    tpu.vector_store %arg19[%c0_40, %c480], %60 {strides = array<i32>} : memref<1x576xf32, #tpu.memory_space<vmem>>, vector<1x48xf32>,
    %62 = vector.extract_strided_slice %39 {offsets = [11, 0], sizes = [1, 48], strides = [1, 1]} : vector<12x48xf32> to vector<1x48xf32>
    %c0_41 = arith.constant 0 : index
    %c528 = arith.constant 528 : index
    %63 = vector.load %arg19[%c0_41, %c528] : memref<1x576xf32, #tpu.memory_space<vmem>>, vector<1x48xf32>
    tpu.vector_store %arg19[%c0_41, %c528], %62 {strides = array<i32>} : memref<1x576xf32, #tpu.memory_space<vmem>>, vector<1x48xf32>,
    %c0_42 = arith.constant 0 : index
    %c0_43 = arith.constant 0 : index
    %64 = vector.load %arg19[%c0_42, %c0_43] : memref<1x576xf32, #tpu.memory_space<vmem>>, vector<1x576xf32>
    %c0_44 = arith.constant 0 : index
    %c0_45 = arith.constant 0 : index
    %65 = vector.load %arg7[%c0_44, %c0_45] : memref<576x64xf32, #tpu.memory_space<vmem>>, vector<576x64xf32>
    %cst_46 = arith.constant dense<0.000000e+00> : vector<1x64xf32>
    %66 = tpu.matmul %64, %65, %cst_46 {dimension_numbers = #tpu.dot_dimension_numbers<[1], [0], [0], [1], [0, 0, 1, 1], [], []>} : vector<1x576xf32>, vector<576x64xf32>, vector<1x64xf32> -> vector<1x64xf32>
    %c0_47 = arith.constant 0 : index
    %c0_48 = arith.constant 0 : index
    %67 = vector.load %arg8[%c0_47, %c0_48] : memref<1x64xf32, #tpu.memory_space<vmem>>, vector<1x64xf32>
    %68 = arith.addf %66, %67 : vector<1x64xf32>
    %c0_49 = arith.constant 0 : index
    %c0_50 = arith.constant 0 : index
    %c0_51 = arith.constant 0 : index
    %69 = vector.load %arg18[%c0_49, %c0_50, %c0_51] : memref<1x1x64xf32, #tpu.memory_space<vmem>>, vector<1x1x64xf32>
    %70 = vector.shape_cast %69 : vector<1x1x64xf32> to vector<1x64xf32>
    %71 = vector.shape_cast %68 : vector<1x64xf32> to vector<1x1x64xf32>
    tpu.vector_store %arg18[%c0_49, %c0_50, %c0_51], %71 {strides = array<i32>} : memref<1x1x64xf32, #tpu.memory_space<vmem>>, vector<1x1x64xf32>,
    %72 = vector.extract_strided_slice %68 {offsets = [0, 0], sizes = [1, 32], strides = [1, 1]} : vector<1x64xf32> to vector<1x32xf32>
    %73 = vector.extract_strided_slice %68 {offsets = [0, 32], sizes = [1, 32], strides = [1, 1]} : vector<1x64xf32> to vector<1x32xf32>
    %c0_52 = arith.constant 0 : index
    %c0_53 = arith.constant 0 : index
    %c0_54 = arith.constant 0 : index
    %74 = vector.load %arg2[%c0_52, %c0_53, %c0_54] : memref<1x1x32xf32, #tpu.memory_space<vmem>>, vector<1x1x32xf32>
    %75 = vector.shape_cast %74 : vector<1x1x32xf32> to vector<1x32xf32>
    %cst_55 = arith.constant 5.000000e-01 : f32
    %76 = vector.broadcast %cst_55 : f32 to vector<1x32xf32>
    %77 = arith.mulf %76, %73 : vector<1x32xf32>
    %78 = math.exp %77 : vector<1x32xf32>
    %79 = arith.mulf %75, %78 : vector<1x32xf32>
    %80 = arith.addf %72, %79 : vector<1x32xf32>
    %c0_56 = arith.constant 0 : index
    %c0_57 = arith.constant 0 : index
    %81 = vector.load %arg9[%c0_56, %c0_57] : memref<32x384xf32, #tpu.memory_space<vmem>>, vector<32x384xf32>
    %cst_58 = arith.constant dense<0.000000e+00> : vector<1x384xf32>
    %82 = tpu.matmul %80, %81, %cst_58 {dimension_numbers = #tpu.dot_dimension_numbers<[1], [0], [0], [1], [0, 0, 1, 1], [], []>} : vector<1x32xf32>, vector<32x384xf32>, vector<1x384xf32> -> vector<1x384xf32>
    %c0_59 = arith.constant 0 : index
    %c0_60 = arith.constant 0 : index
    %83 = vector.load %arg10[%c0_59, %c0_60] : memref<12x384xf32, #tpu.memory_space<vmem>>, vector<12x384xf32>
    %84 = vector.broadcast %82 : vector<1x384xf32> to vector<12x384xf32>
    %85 = arith.mulf %84, %83 : vector<12x384xf32>
    %c0_61 = arith.constant 0 : index
    %c0_62 = arith.constant 0 : index
    %86 = vector.load %arg11[%c0_61, %c0_62] : memref<384x48xf32, #tpu.memory_space<vmem>>, vector<384x48xf32>
    %cst_63 = arith.constant dense<0.000000e+00> : vector<12x48xf32>
    %87 = tpu.matmul %85, %86, %cst_63 {dimension_numbers = #tpu.dot_dimension_numbers<[1], [0], [0], [1], [0, 0, 1, 1], [], []>} : vector<12x384xf32>, vector<384x48xf32>, vector<12x48xf32> -> vector<12x48xf32>
    %c0_64 = arith.constant 0 : index
    %c0_65 = arith.constant 0 : index
    %88 = vector.load %arg12[%c0_64, %c0_65] : memref<12x48xf32, #tpu.memory_space<vmem>>, vector<12x48xf32>
    %89 = arith.addf %87, %88 : vector<12x48xf32>
    %cst_66 = arith.constant 0.000000e+00 : f32
    %90 = vector.broadcast %cst_66 : f32 to vector<2x48xf32>
    %c0_67 = arith.constant 0 : index
    %c0_68 = arith.constant 0 : index
    %91 = vector.load %arg20[%c0_67, %c0_68] : memref<16x48xf32, #tpu.memory_space<vmem>>, vector<2x48xf32>
    tpu.vector_store %arg20[%c0_67, %c0_68], %90 {strides = array<i32>} : memref<16x48xf32, #tpu.memory_space<vmem>>, vector<2x48xf32>,
    %cst_69 = arith.constant 0.000000e+00 : f32
    %92 = vector.broadcast %cst_69 : f32 to vector<2x48xf32>
    %c14 = arith.constant 14 : index
    %c0_70 = arith.constant 0 : index
    %93 = vector.load %arg20[%c14, %c0_70] : memref<16x48xf32, #tpu.memory_space<vmem>>, vector<2x48xf32>
    tpu.vector_store %arg20[%c14, %c0_70], %92 {strides = array<i32>} : memref<16x48xf32, #tpu.memory_space<vmem>>, vector<2x48xf32>,
    %c2_71 = arith.constant 2 : index
    %c0_72 = arith.constant 0 : index
    %94 = vector.load %arg20[%c2_71, %c0_72] : memref<16x48xf32, #tpu.memory_space<vmem>>, vector<12x48xf32>
    tpu.vector_store %arg20[%c2_71, %c0_72], %89 {strides = array<i32>} : memref<16x48xf32, #tpu.memory_space<vmem>>, vector<12x48xf32>,
    %c0_73 = arith.constant 0 : index
    %c0_74 = arith.constant 0 : index
    %95 = vector.load %arg20[%c0_73, %c0_74] : memref<16x48xf32, #tpu.memory_space<vmem>>, vector<16x48xf32>
    %96 = vector.extract_strided_slice %95 {offsets = [0, 0], sizes = [14, 48], strides = [1, 1]} : vector<16x48xf32> to vector<14x48xf32>
    %c0_75 = arith.constant 0 : index
    %c0_76 = arith.constant 0 : index
    %c0_77 = arith.constant 0 : index
    %97 = vector.load %arg13[%c0_75, %c0_76, %c0_77] : memref<3x48x224xf32, #tpu.memory_space<vmem>>, vector<1x48x224xf32>
    %98 = vector.shape_cast %97 : vector<1x48x224xf32> to vector<48x224xf32>
    %cst_78 = arith.constant dense<0.000000e+00> : vector<14x224xf32>
    %99 = tpu.matmul %96, %98, %cst_78 {dimension_numbers = #tpu.dot_dimension_numbers<[1], [0], [0], [1], [0, 0, 1, 1], [], []>} : vector<14x48xf32>, vector<48x224xf32>, vector<14x224xf32> -> vector<14x224xf32>
    %100 = vector.extract_strided_slice %95 {offsets = [1, 0], sizes = [14, 48], strides = [1, 1]} : vector<16x48xf32> to vector<14x48xf32>
    %c1_79 = arith.constant 1 : index
    %c0_80 = arith.constant 0 : index
    %c0_81 = arith.constant 0 : index
    %101 = vector.load %arg13[%c1_79, %c0_80, %c0_81] : memref<3x48x224xf32, #tpu.memory_space<vmem>>, vector<1x48x224xf32>
    %102 = vector.shape_cast %101 : vector<1x48x224xf32> to vector<48x224xf32>
    %cst_82 = arith.constant dense<0.000000e+00> : vector<14x224xf32>
    %103 = tpu.matmul %100, %102, %cst_82 {dimension_numbers = #tpu.dot_dimension_numbers<[1], [0], [0], [1], [0, 0, 1, 1], [], []>} : vector<14x48xf32>, vector<48x224xf32>, vector<14x224xf32> -> vector<14x224xf32>
    %104 = arith.addf %99, %103 : vector<14x224xf32>
    %105 = vector.extract_strided_slice %95 {offsets = [2, 0], sizes = [14, 48], strides = [1, 1]} : vector<16x48xf32> to vector<14x48xf32>
    %c2_83 = arith.constant 2 : index
    %c0_84 = arith.constant 0 : index
    %c0_85 = arith.constant 0 : index
    %106 = vector.load %arg13[%c2_83, %c0_84, %c0_85] : memref<3x48x224xf32, #tpu.memory_space<vmem>>, vector<1x48x224xf32>
    %107 = vector.shape_cast %106 : vector<1x48x224xf32> to vector<48x224xf32>
    %cst_86 = arith.constant dense<0.000000e+00> : vector<14x224xf32>
    %108 = tpu.matmul %105, %107, %cst_86 {dimension_numbers = #tpu.dot_dimension_numbers<[1], [0], [0], [1], [0, 0, 1, 1], [], []>} : vector<14x48xf32>, vector<48x224xf32>, vector<14x224xf32> -> vector<14x224xf32>
    %109 = arith.addf %104, %108 : vector<14x224xf32>
    %c0_87 = arith.constant 0 : index
    %c0_88 = arith.constant 0 : index
    %110 = vector.load %arg14[%c0_87, %c0_88] : memref<1x224xf32, #tpu.memory_space<vmem>>, vector<1x224xf32>
    %111 = vector.broadcast %110 : vector<1x224xf32> to vector<14x224xf32>
    %112 = arith.addf %109, %111 : vector<14x224xf32>
    %cst_89 = arith.constant 0.000000e+00 : f32
    %113 = vector.broadcast %cst_89 : f32 to vector<14x224xf32>
    %114 = arith.maximumf %112, %113 : vector<14x224xf32>
    %cst_90 = arith.constant 0.000000e+00 : f32
    %115 = vector.broadcast %cst_90 : f32 to vector<2x224xf32>
    %c0_91 = arith.constant 0 : index
    %c0_92 = arith.constant 0 : index
    %116 = vector.load %arg21[%c0_91, %c0_92] : memref<18x224xf32, #tpu.memory_space<vmem>>, vector<2x224xf32>
    tpu.vector_store %arg21[%c0_91, %c0_92], %115 {strides = array<i32>} : memref<18x224xf32, #tpu.memory_space<vmem>>, vector<2x224xf32>,
    %cst_93 = arith.constant 0.000000e+00 : f32
    %117 = vector.broadcast %cst_93 : f32 to vector<2x224xf32>
    %c16 = arith.constant 16 : index
    %c0_94 = arith.constant 0 : index
    %118 = vector.load %arg21[%c16, %c0_94] : memref<18x224xf32, #tpu.memory_space<vmem>>, vector<2x224xf32>
    tpu.vector_store %arg21[%c16, %c0_94], %117 {strides = array<i32>} : memref<18x224xf32, #tpu.memory_space<vmem>>, vector<2x224xf32>,
    %c2_95 = arith.constant 2 : index
    %c0_96 = arith.constant 0 : index
    %119 = vector.load %arg21[%c2_95, %c0_96] : memref<18x224xf32, #tpu.memory_space<vmem>>, vector<14x224xf32>
    tpu.vector_store %arg21[%c2_95, %c0_96], %114 {strides = array<i32>} : memref<18x224xf32, #tpu.memory_space<vmem>>, vector<14x224xf32>,
    %c0_97 = arith.constant 0 : index
    %c0_98 = arith.constant 0 : index
    %120 = vector.load %arg21[%c0_97, %c0_98] : memref<18x224xf32, #tpu.memory_space<vmem>>, vector<18x224xf32>
    %121 = vector.extract_strided_slice %120 {offsets = [0, 0], sizes = [16, 224], strides = [1, 1]} : vector<18x224xf32> to vector<16x224xf32>
    %c0_99 = arith.constant 0 : index
    %c0_100 = arith.constant 0 : index
    %c0_101 = arith.constant 0 : index
    %122 = vector.load %arg15[%c0_99, %c0_100, %c0_101] : memref<3x224x64xf32, #tpu.memory_space<vmem>>, vector<1x224x64xf32>
    %123 = vector.shape_cast %122 : vector<1x224x64xf32> to vector<224x64xf32>
    %cst_102 = arith.constant dense<0.000000e+00> : vector<16x64xf32>
    %124 = tpu.matmul %121, %123, %cst_102 {dimension_numbers = #tpu.dot_dimension_numbers<[1], [0], [0], [1], [0, 0, 1, 1], [], []>} : vector<16x224xf32>, vector<224x64xf32>, vector<16x64xf32> -> vector<16x64xf32>
    %125 = vector.extract_strided_slice %120 {offsets = [1, 0], sizes = [16, 224], strides = [1, 1]} : vector<18x224xf32> to vector<16x224xf32>
    %c1_103 = arith.constant 1 : index
    %c0_104 = arith.constant 0 : index
    %c0_105 = arith.constant 0 : index
    %126 = vector.load %arg15[%c1_103, %c0_104, %c0_105] : memref<3x224x64xf32, #tpu.memory_space<vmem>>, vector<1x224x64xf32>
    %127 = vector.shape_cast %126 : vector<1x224x64xf32> to vector<224x64xf32>
    %cst_106 = arith.constant dense<0.000000e+00> : vector<16x64xf32>
    %128 = tpu.matmul %125, %127, %cst_106 {dimension_numbers = #tpu.dot_dimension_numbers<[1], [0], [0], [1], [0, 0, 1, 1], [], []>} : vector<16x224xf32>, vector<224x64xf32>, vector<16x64xf32> -> vector<16x64xf32>
    %129 = arith.addf %124, %128 : vector<16x64xf32>
    %130 = vector.extract_strided_slice %120 {offsets = [2, 0], sizes = [16, 224], strides = [1, 1]} : vector<18x224xf32> to vector<16x224xf32>
    %c2_107 = arith.constant 2 : index
    %c0_108 = arith.constant 0 : index
    %c0_109 = arith.constant 0 : index
    %131 = vector.load %arg15[%c2_107, %c0_108, %c0_109] : memref<3x224x64xf32, #tpu.memory_space<vmem>>, vector<1x224x64xf32>
    %132 = vector.shape_cast %131 : vector<1x224x64xf32> to vector<224x64xf32>
    %cst_110 = arith.constant dense<0.000000e+00> : vector<16x64xf32>
    %133 = tpu.matmul %130, %132, %cst_110 {dimension_numbers = #tpu.dot_dimension_numbers<[1], [0], [0], [1], [0, 0, 1, 1], [], []>} : vector<16x224xf32>, vector<224x64xf32>, vector<16x64xf32> -> vector<16x64xf32>
    %134 = arith.addf %129, %133 : vector<16x64xf32>
    %c0_111 = arith.constant 0 : index
    %c0_112 = arith.constant 0 : index
    %135 = vector.load %arg16[%c0_111, %c0_112] : memref<1x64xf32, #tpu.memory_space<vmem>>, vector<1x64xf32>
    %136 = vector.broadcast %135 : vector<1x64xf32> to vector<16x64xf32>
    %137 = arith.addf %134, %136 : vector<16x64xf32>
    %138 = arith.negf %137 : vector<16x64xf32>
    %139 = math.exp %138 : vector<16x64xf32>
    %cst_113 = arith.constant 1.000000e+00 : f32
    %140 = vector.broadcast %cst_113 : f32 to vector<16x64xf32>
    %141 = arith.addf %140, %139 : vector<16x64xf32>
    %142 = arith.divf %140, %141 : vector<16x64xf32>
    %c0_114 = arith.constant 0 : index
    %c0_115 = arith.constant 0 : index
    %c0_116 = arith.constant 0 : index
    %143 = vector.load %arg17[%c0_114, %c0_115, %c0_116] : memref<1x16x64xf32, #tpu.memory_space<vmem>>, vector<1x16x64xf32>
    %144 = vector.shape_cast %143 : vector<1x16x64xf32> to vector<16x64xf32>
    %145 = vector.shape_cast %142 : vector<16x64xf32> to vector<1x16x64xf32>
    tpu.vector_store %arg17[%c0_114, %c0_115, %c0_116], %145 {strides = array<i32>} : memref<1x16x64xf32, #tpu.memory_space<vmem>>, vector<1x16x64xf32>,
    return
  }
  func.func @transform_0(%arg0: i32) -> (i32, i32, i32) {
    %c0_i32 = arith.constant 0 : i32
    %c0_i32_0 = arith.constant 0 : i32
    %c0_i32_1 = arith.constant 0 : i32
    return %arg0, %c0_i32, %c0_i32_0 : i32, i32, i32
  }
  func.func @transform_1(%arg0: i32) -> (i32, i32, i32) {
    %c0_i32 = arith.constant 0 : i32
    %c0_i32_0 = arith.constant 0 : i32
    %c0_i32_1 = arith.constant 0 : i32
    return %arg0, %c0_i32, %c0_i32_0 : i32, i32, i32
  }
  func.func @transform_2(%arg0: i32) -> (i32, i32, i32) {
    %c0_i32 = arith.constant 0 : i32
    %c0_i32_0 = arith.constant 0 : i32
    %c0_i32_1 = arith.constant 0 : i32
    %c0_i32_2 = arith.constant 0 : i32
    return %c0_i32, %c0_i32_0, %c0_i32_1 : i32, i32, i32
  }
  func.func @transform_3(%arg0: i32) -> (i32, i32) {
    %c0_i32 = arith.constant 0 : i32
    %c0_i32_0 = arith.constant 0 : i32
    %c0_i32_1 = arith.constant 0 : i32
    return %c0_i32, %c0_i32_0 : i32, i32
  }
  func.func @transform_4(%arg0: i32) -> (i32, i32, i32) {
    %c0_i32 = arith.constant 0 : i32
    %c0_i32_0 = arith.constant 0 : i32
    %c0_i32_1 = arith.constant 0 : i32
    %c0_i32_2 = arith.constant 0 : i32
    return %c0_i32, %c0_i32_0, %c0_i32_1 : i32, i32, i32
  }
  func.func @transform_5(%arg0: i32) -> (i32, i32) {
    %c0_i32 = arith.constant 0 : i32
    %c0_i32_0 = arith.constant 0 : i32
    %c0_i32_1 = arith.constant 0 : i32
    return %c0_i32, %c0_i32_0 : i32, i32
  }
  func.func @transform_6(%arg0: i32) -> (i32, i32) {
    %c0_i32 = arith.constant 0 : i32
    %c0_i32_0 = arith.constant 0 : i32
    %c0_i32_1 = arith.constant 0 : i32
    return %c0_i32, %c0_i32_0 : i32, i32
  }
  func.func @transform_7(%arg0: i32) -> (i32, i32) {
    %c0_i32 = arith.constant 0 : i32
    %c0_i32_0 = arith.constant 0 : i32
    %c0_i32_1 = arith.constant 0 : i32
    return %c0_i32, %c0_i32_0 : i32, i32
  }
  func.func @transform_8(%arg0: i32) -> (i32, i32) {
    %c0_i32 = arith.constant 0 : i32
    %c0_i32_0 = arith.constant 0 : i32
    %c0_i32_1 = arith.constant 0 : i32
    return %c0_i32, %c0_i32_0 : i32, i32
  }
  func.func @transform_9(%arg0: i32) -> (i32, i32) {
    %c0_i32 = arith.constant 0 : i32
    %c0_i32_0 = arith.constant 0 : i32
    %c0_i32_1 = arith.constant 0 : i32
    return %c0_i32, %c0_i32_0 : i32, i32
  }
  func.func @transform_10(%arg0: i32) -> (i32, i32) {
    %c0_i32 = arith.constant 0 : i32
    %c0_i32_0 = arith.constant 0 : i32
    %c0_i32_1 = arith.constant 0 : i32
    return %c0_i32, %c0_i32_0 : i32, i32
  }
  func.func @transform_11(%arg0: i32) -> (i32, i32) {
    %c0_i32 = arith.constant 0 : i32
    %c0_i32_0 = arith.constant 0 : i32
    %c0_i32_1 = arith.constant 0 : i32
    return %c0_i32, %c0_i32_0 : i32, i32
  }
  func.func @transform_12(%arg0: i32) -> (i32, i32, i32) {
    %c0_i32 = arith.constant 0 : i32
    %c0_i32_0 = arith.constant 0 : i32
    %c0_i32_1 = arith.constant 0 : i32
    %c0_i32_2 = arith.constant 0 : i32
    return %c0_i32, %c0_i32_0, %c0_i32_1 : i32, i32, i32
  }
  func.func @transform_13(%arg0: i32) -> (i32, i32) {
    %c0_i32 = arith.constant 0 : i32
    %c0_i32_0 = arith.constant 0 : i32
    %c0_i32_1 = arith.constant 0 : i32
    return %c0_i32, %c0_i32_0 : i32, i32
  }
  func.func @transform_14(%arg0: i32) -> (i32, i32, i32) {
    %c0_i32 = arith.constant 0 : i32
    %c0_i32_0 = arith.constant 0 : i32
    %c0_i32_1 = arith.constant 0 : i32
    %c0_i32_2 = arith.constant 0 : i32
    return %c0_i32, %c0_i32_0, %c0_i32_1 : i32, i32, i32
  }
  func.func @transform_15(%arg0: i32) -> (i32, i32) {
    %c0_i32 = arith.constant 0 : i32
    %c0_i32_0 = arith.constant 0 : i32
    %c0_i32_1 = arith.constant 0 : i32
    return %c0_i32, %c0_i32_0 : i32, i32
  }
  func.func @transform_16(%arg0: i32) -> (i32, i32, i32) {
    %c0_i32 = arith.constant 0 : i32
    %c0_i32_0 = arith.constant 0 : i32
    %c0_i32_1 = arith.constant 0 : i32
    return %arg0, %c0_i32, %c0_i32_0 : i32, i32, i32
  }
  func.func @transform_17(%arg0: i32) -> (i32, i32, i32) {
    %c0_i32 = arith.constant 0 : i32
    %c0_i32_0 = arith.constant 0 : i32
    %c0_i32_1 = arith.constant 0 : i32
    return %arg0, %c0_i32, %c0_i32_0 : i32, i32, i32
  }
}

</mosaic_0001>

<llo_original>
// kernel: toad_level_vae_forward.1
$region0: #{toad_level_vae_forward.1}
  #allocation0 [shape = 'u32[]', space=smem, size = 0x4, offset = 0x4, fixed_abs, tag = 'smem constant byte address 0x4 - core index']
  #allocation1 [shape = 'u32[72,128]{1,0:T(1,128)}', space=vmem, size = 0x9000, scoped, tag = 'internal scratch']
  #allocation2 [shape = 'f32[1,576]{1,0:T(1,128)}', space=vmem, size = 0xa00, scoped, tag = 'scratch operand']
  #allocation3 [shape = 'f32[16,48]{1,0:T(8,128)}', space=vmem, size = 0x2000, scoped, tag = 'scratch operand']
  #allocation4 [shape = 'f32[18,224]{1,0:T(8,128)}', space=vmem, size = 0x6000, scoped, tag = 'scratch operand']
  %s0 = inlined_call_operand.vmem [shape: f32[2,16,64], index: 0, kind: input, shape index: {}]
  %s1 = inlined_call_operand.vmem [shape: f32[2,1,32], index: 1, kind: input, shape index: {}]
  %s2 = inlined_call_operand.vmem [shape: f32[3,64,224], index: 2, kind: input, shape index: {}]
  %s3 = inlined_call_operand.vmem [shape: f32[1,224], index: 3, kind: input, shape index: {}]
  %s4 = inlined_call_operand.vmem [shape: f32[3,224,48], index: 4, kind: input, shape index: {}]
  %s5 = inlined_call_operand.vmem [shape: f32[1,48], index: 5, kind: input, shape index: {}]
  %s6 = inlined_call_operand.vmem [shape: f32[576,64], index: 6, kind: input, shape index: {}]
  %s7 = inlined_call_operand.vmem [shape: f32[1,64], index: 7, kind: input, shape index: {}]
  %s8 = inlined_call_operand.vmem [shape: f32[32,384], index: 8, kind: input, shape index: {}]
  %s9 = inlined_call_operand.vmem [shape: f32[12,384], index: 9, kind: input, shape index: {}]
  %s10 = inlined_call_operand.vmem [shape: f32[384,48], index: 10, kind: input, shape index: {}]
  %s11 = inlined_call_operand.vmem [shape: f32[12,48], index: 11, kind: input, shape index: {}]
  %s12 = inlined_call_operand.vmem [shape: f32[3,48,224], index: 12, kind: input, shape index: {}]
  %s13 = inlined_call_operand.vmem [shape: f32[1,224], index: 13, kind: input, shape index: {}]
  %s14 = inlined_call_operand.vmem [shape: f32[3,224,64], index: 14, kind: input, shape index: {}]
  %s15 = inlined_call_operand.vmem [shape: f32[1,64], index: 15, kind: input, shape index: {}]
  %s16 = inlined_call_operand.vmem [shape: f32[2,16,64], index: 16, kind: output, shape index: {0}]
  %s17 = inlined_call_operand.vmem [shape: f32[2,1,64], index: 17, kind: output, shape index: {1}]
  %18 = xla_tuple %s16, %s17
  %s19 = sld [smem:[#allocation0]]
  $region105: #{toad_level_vae_forward.1} parent=0
    _
  %s21 = ssub.s32 1, %s19
  %s22 = scalar_select 0, %s21, %s19
  loop: start=0, step=1, limit=4
  $region2: #{toad_level_vae_forward.1} parent=0 // loop_pre_header
    _
  $region3: #{toad_level_vae_forward.1} parent=0 // loop_header
    %s24 = sphi 0, %s28
    %p25 = scmp.ge.s32.totalorder %s24, 4
    %s34 = sphi 0, %s36
    %s37 = sphi 0, %s34
    %s38 = sphi 0, %s37
    %s54 = sphi 0, %s38
    %s60 = sphi 0, %s62
    %s63 = sphi 0, %s60
    %s64 = sphi 0, %s63
    %s80 = sphi 0, %s64
    %s84 = sphi 0, %s84
    %s86 = sphi 0, %s84
    %s87 = sphi 0, %s86
    %s101 = sphi 0, %s87
    %s105 = sphi 0, %s105
    %s107 = sphi 0, %s105
    %s108 = sphi 0, %s107
    %s122 = sphi 0, %s108
    %s126 = sphi 0, %s126
    %s128 = sphi 0, %s126
    %s129 = sphi 0, %s128
    %s143 = sphi 0, %s129
    %s147 = sphi 0, %s147
    %s149 = sphi 0, %s147
    %s150 = sphi 0, %s149
    %s164 = sphi 0, %s150
    %s168 = sphi 0, %s168
    %s170 = sphi 0, %s168
    %s171 = sphi 0, %s170
    %s185 = sphi 0, %s171
    %s189 = sphi 0, %s189
    %s191 = sphi 0, %s189
    %s192 = sphi 0, %s191
    %s206 = sphi 0, %s192
    %s210 = sphi 0, %s210
    %s212 = sphi 0, %s210
    %s213 = sphi 0, %s212
    %s227 = sphi 0, %s213
    %s231 = sphi 0, %s231
    %s233 = sphi 0, %s231
    %s234 = sphi 0, %s233
    %s248 = sphi 0, %s234
    %s252 = sphi 0, %s252
    %s254 = sphi 0, %s252
    %s255 = sphi 0, %s254
    %s269 = sphi 0, %s255
    %s273 = sphi 0, %s273
    %s275 = sphi 0, %s273
    %s276 = sphi 0, %s275
    %s290 = sphi 0, %s276
    %s294 = sphi 0, %s294
    %s296 = sphi 0, %s294
    %s297 = sphi 0, %s296
    %s311 = sphi 0, %s297
    %s315 = sphi 0, %s315
    %s317 = sphi 0, %s315
    %s318 = sphi 0, %s317
    %s332 = sphi 0, %s318
    %s336 = sphi 0, %s336
    %s338 = sphi 0, %s336
    %s339 = sphi 0, %s338
    %s353 = sphi 0, %s339
    %s357 = sphi 0, %s357
    %s359 = sphi 0, %s357
    %s360 = sphi 0, %s359
    %s374 = sphi 0, %s360
    %s380 = sphi 0, %s382
    %s383 = sphi 0, %s380
    %s384 = sphi 0, %s383
    %s400 = sphi 0, %s384
    %s406 = sphi 0, %s408
    %s409 = sphi 0, %s406
    %s410 = sphi 0, %s409
    %s426 = sphi 0, %s410
  $region4: #{toad_level_vae_forward.1} parent=0 // loop_header_branch
    %27 = sbr.rel (%p25) target = $region8
  $region5: #{toad_level_vae_forward.1} parent=0 // loop_body
    %s29 = ssub.s32 %s24, 1
    %s30 = ssub.s32 %s24, 2
    %s31 = sadd.s32 %s24, 1
    %s32 = ssub.s32 %s24, %s31
    %p33 = scmp.eq.s32.totalorder %s32, 0
    %s35 = sadd.s32 %s34, 1
    %s36 = scalar_select %p33, %s34, %s35
    %p39 = pneg %p33
    %p40 = scmp.eq.s32.totalorder %s24, 1
    %p41 = por %p39, %p40
    %p42 = scmp.ne.s32.totalorder %s34, %s37
    %p43 = scmp.eq.s32.totalorder %s24, 0
    %p44 = por %p42, %p43
    %p45 = scmp.ne.s32.totalorder %s34, %s37
    %p46 = scmp.eq.s32.totalorder %s29, 1
    %p47 = por %p45, %p46
    %p48 = scmp.ne.s32.totalorder %s37, %s38
    %p49 = scmp.eq.s32.totalorder %s29, 0
    %p50 = por %p48, %p49
    %p51 = scmp.ne.s32.totalorder %s37, %s38
    %p52 = scmp.eq.s32.totalorder %s30, 1
    %p53 = por %p51, %p52
    %p55 = scmp.ne.s32.totalorder %s38, %s54
    %p56 = scmp.eq.s32.totalorder %s30, 0
    %p57 = por %p55, %p56
    %s58 = ssub.s32 %s24, %s31
    %p59 = scmp.eq.s32.totalorder %s58, 0
    %s61 = sadd.s32 %s60, 1
    %s62 = scalar_select %p59, %s60, %s61
    %p65 = pneg %p59
    %p66 = scmp.eq.s32.totalorder %s24, 1
    %p67 = por %p65, %p66
    %p68 = scmp.ne.s32.totalorder %s60, %s63
    %p69 = scmp.eq.s32.totalorder %s24, 0
    %p70 = por %p68, %p69
    %p71 = scmp.ne.s32.totalorder %s60, %s63
    %p72 = scmp.eq.s32.totalorder %s29, 1
    %p73 = por %p71, %p72
    %p74 = scmp.ne.s32.totalorder %s63, %s64
    %p75 = scmp.eq.s32.totalorder %s29, 0
    %p76 = por %p74, %p75
    %p77 = scmp.ne.s32.totalorder %s63, %s64
    %p78 = scmp.eq.s32.totalorder %s30, 1
    %p79 = por %p77, %p78
    %p81 = scmp.ne.s32.totalorder %s64, %s80
    %p82 = scmp.eq.s32.totalorder %s30, 0
    %p83 = por %p81, %p82
    %s85 = sadd.s32 %s84, 1
    %p88 = scmp.eq.s32.totalorder %s24, 1
    %p89 = scmp.ne.s32.totalorder %s84, %s86
    %p90 = scmp.eq.s32.totalorder %s24, 0
    %p91 = por %p89, %p90
    %p92 = scmp.ne.s32.totalorder %s84, %s86
    %p93 = scmp.eq.s32.totalorder %s29, 1
    %p94 = por %p92, %p93
    %p95 = scmp.ne.s32.totalorder %s86, %s87
    %p96 = scmp.eq.s32.totalorder %s29, 0
    %p97 = por %p95, %p96
    %p98 = scmp.ne.s32.totalorder %s86, %s87
    %p99 = scmp.eq.s32.totalorder %s30, 1
    %p100 = por %p98, %p99
    %p102 = scmp.ne.s32.totalorder %s87, %s101
    %p103 = scmp.eq.s32.totalorder %s30, 0
    %p104 = por %p102, %p103
    %s106 = sadd.s32 %s105, 1
    %p109 = scmp.eq.s32.totalorder %s24, 1
    %p110 = scmp.ne.s32.totalorder %s105, %s107
    %p111 = scmp.eq.s32.totalorder %s24, 0
    %p112 = por %p110, %p111
    %p113 = scmp.ne.s32.totalorder %s105, %s107
    %p114 = scmp.eq.s32.totalorder %s29, 1
    %p115 = por %p113, %p114
    %p116 = scmp.ne.s32.totalorder %s107, %s108
    %p117 = scmp.eq.s32.totalorder %s29, 0
    %p118 = por %p116, %p117
    %p119 = scmp.ne.s32.totalorder %s107, %s108
    %p120 = scmp.eq.s32.totalorder %s30, 1
    %p121 = por %p119, %p120
    %p123 = scmp.ne.s32.totalorder %s108, %s122
    %p124 = scmp.eq.s32.totalorder %s30, 0
    %p125 = por %p123, %p124
    %s127 = sadd.s32 %s126, 1
    %p130 = scmp.eq.s32.totalorder %s24, 1
    %p131 = scmp.ne.s32.totalorder %s126, %s128
    %p132 = scmp.eq.s32.totalorder %s24, 0
    %p133 = por %p131, %p132
    %p134 = scmp.ne.s32.totalorder %s126, %s128
    %p135 = scmp.eq.s32.totalorder %s29, 1
    %p136 = por %p134, %p135
    %p137 = scmp.ne.s32.totalorder %s128, %s129
    %p138 = scmp.eq.s32.totalorder %s29, 0
    %p139 = por %p137, %p138
    %p140 = scmp.ne.s32.totalorder %s128, %s129
    %p141 = scmp.eq.s32.totalorder %s30, 1
    %p142 = por %p140, %p141
    %p144 = scmp.ne.s32.totalorder %s129, %s143
    %p145 = scmp.eq.s32.totalorder %s30, 0
    %p146 = por %p144, %p145
    %s148 = sadd.s32 %s147, 1
    %p151 = scmp.eq.s32.totalorder %s24, 1
    %p152 = scmp.ne.s32.totalorder %s147, %s149
    %p153 = scmp.eq.s32.totalorder %s24, 0
    %p154 = por %p152, %p153
    %p155 = scmp.ne.s32.totalorder %s147, %s149
    %p156 = scmp.eq.s32.totalorder %s29, 1
    %p157 = por %p155, %p156
    %p158 = scmp.ne.s32.totalorder %s149, %s150
    %p159 = scmp.eq.s32.totalorder %s29, 0
    %p160 = por %p158, %p159
    %p161 = scmp.ne.s32.totalorder %s149, %s150
    %p162 = scmp.eq.s32.totalorder %s30, 1
    %p163 = por %p161, %p162
    %p165 = scmp.ne.s32.totalorder %s150, %s164
    %p166 = scmp.eq.s32.totalorder %s30, 0
    %p167 = por %p165, %p166
    %s169 = sadd.s32 %s168, 1
    %p172 = scmp.eq.s32.totalorder %s24, 1
    %p173 = scmp.ne.s32.totalorder %s168, %s170
    %p174 = scmp.eq.s32.totalorder %s24, 0
    %p175 = por %p173, %p174
    %p176 = scmp.ne.s32.totalorder %s168, %s170
    %p177 = scmp.eq.s32.totalorder %s29, 1
    %p178 = por %p176, %p177
    %p179 = scmp.ne.s32.totalorder %s170, %s171
    %p180 = scmp.eq.s32.totalorder %s29, 0
    %p181 = por %p179, %p180
    %p182 = scmp.ne.s32.totalorder %s170, %s171
    %p183 = scmp.eq.s32.totalorder %s30, 1
    %p184 = por %p182, %p183
    %p186 = scmp.ne.s32.totalorder %s171, %s185
    %p187 = scmp.eq.s32.totalorder %s30, 0
    %p188 = por %p186, %p187
    %s190 = sadd.s32 %s189, 1
    %p193 = scmp.eq.s32.totalorder %s24, 1
    %p194 = scmp.ne.s32.totalorder %s189, %s191
    %p195 = scmp.eq.s32.totalorder %s24, 0
    %p196 = por %p194, %p195
    %p197 = scmp.ne.s32.totalorder %s189, %s191
    %p198 = scmp.eq.s32.totalorder %s29, 1
    %p199 = por %p197, %p198
    %p200 = scmp.ne.s32.totalorder %s191, %s192
    %p201 = scmp.eq.s32.totalorder %s29, 0
    %p202 = por %p200, %p201
    %p203 = scmp.ne.s32.totalorder %s191, %s192
    %p204 = scmp.eq.s32.totalorder %s30, 1
    %p205 = por %p203, %p204
    %p207 = scmp.ne.s32.totalorder %s192, %s206
    %p208 = scmp.eq.s32.totalorder %s30, 0
    %p209 = por %p207, %p208
    %s211 = sadd.s32 %s210, 1
    %p214 = scmp.eq.s32.totalorder %s24, 1
    %p215 = scmp.ne.s32.totalorder %s210, %s212
    %p216 = scmp.eq.s32.totalorder %s24, 0
    %p217 = por %p215, %p216
    %p218 = scmp.ne.s32.totalorder %s210, %s212
    %p219 = scmp.eq.s32.totalorder %s29, 1
    %p220 = por %p218, %p219
    %p221 = scmp.ne.s32.totalorder %s212, %s213
    %p222 = scmp.eq.s32.totalorder %s29, 0
    %p223 = por %p221, %p222
    %p224 = scmp.ne.s32.totalorder %s212, %s213
    %p225 = scmp.eq.s32.totalorder %s30, 1
    %p226 = por %p224, %p225
    %p228 = scmp.ne.s32.totalorder %s213, %s227
    %p229 = scmp.eq.s32.totalorder %s30, 0
    %p230 = por %p228, %p229
    %s232 = sadd.s32 %s231, 1
    %p235 = scmp.eq.s32.totalorder %s24, 1
    %p236 = scmp.ne.s32.totalorder %s231, %s233
    %p237 = scmp.eq.s32.totalorder %s24, 0
    %p238 = por %p236, %p237
    %p239 = scmp.ne.s32.totalorder %s231, %s233
    %p240 = scmp.eq.s32.totalorder %s29, 1
    %p241 = por %p239, %p240
    %p242 = scmp.ne.s32.totalorder %s233, %s234
    %p243 = scmp.eq.s32.totalorder %s29, 0
    %p244 = por %p242, %p243
    %p245 = scmp.ne.s32.totalorder %s233, %s234
    %p246 = scmp.eq.s32.totalorder %s30, 1
    %p247 = por %p245, %p246
    %p249 = scmp.ne.s32.totalorder %s234, %s248
    %p250 = scmp.eq.s32.totalorder %s30, 0
    %p251 = por %p249, %p250
    %s253 = sadd.s32 %s252, 1
    %p256 = scmp.eq.s32.totalorder %s24, 1
    %p257 = scmp.ne.s32.totalorder %s252, %s254
    %p258 = scmp.eq.s32.totalorder %s24, 0
    %p259 = por %p257, %p258
    %p260 = scmp.ne.s32.totalorder %s252, %s254
    %p261 = scmp.eq.s32.totalorder %s29, 1
    %p262 = por %p260, %p261
    %p263 = scmp.ne.s32.totalorder %s254, %s255
    %p264 = scmp.eq.s32.totalorder %s29, 0
    %p265 = por %p263, %p264
    %p266 = scmp.ne.s32.totalorder %s254, %s255
    %p267 = scmp.eq.s32.totalorder %s30, 1
    %p268 = por %p266, %p267
    %p270 = scmp.ne.s32.totalorder %s255, %s269
    %p271 = scmp.eq.s32.totalorder %s30, 0
    %p272 = por %p270, %p271
    %s274 = sadd.s32 %s273, 1
    %p277 = scmp.eq.s32.totalorder %s24, 1
    %p278 = scmp.ne.s32.totalorder %s273, %s275
    %p279 = scmp.eq.s32.totalorder %s24, 0
    %p280 = por %p278, %p279
    %p281 = scmp.ne.s32.totalorder %s273, %s275
    %p282 = scmp.eq.s32.totalorder %s29, 1
    %p283 = por %p281, %p282
    %p284 = scmp.ne.s32.totalorder %s275, %s276
    %p285 = scmp.eq.s32.totalorder %s29, 0
    %p286 = por %p284, %p285
    %p287 = scmp.ne.s32.totalorder %s275, %s276
    %p288 = scmp.eq.s32.totalorder %s30, 1
    %p289 = por %p287, %p288
    %p291 = scmp.ne.s32.totalorder %s276, %s290
    %p292 = scmp.eq.s32.totalorder %s30, 0
    %p293 = por %p291, %p292
    %s295 = sadd.s32 %s294, 1
    %p298 = scmp.eq.s32.totalorder %s24, 1
    %p299 = scmp.ne.s32.totalorder %s294, %s296
    %p300 = scmp.eq.s32.totalorder %s24, 0
    %p301 = por %p299, %p300
    %p302 = scmp.ne.s32.totalorder %s294, %s296
    %p303 = scmp.eq.s32.totalorder %s29, 1
    %p304 = por %p302, %p303
    %p305 = scmp.ne.s32.totalorder %s296, %s297
    %p306 = scmp.eq.s32.totalorder %s29, 0
    %p307 = por %p305, %p306
    %p308 = scmp.ne.s32.totalorder %s296, %s297
    %p309 = scmp.eq.s32.totalorder %s30, 1
    %p310 = por %p308, %p309
    %p312 = scmp.ne.s32.totalorder %s297, %s311
    %p313 = scmp.eq.s32.totalorder %s30, 0
    %p314 = por %p312, %p313
    %s316 = sadd.s32 %s315, 1
    %p319 = scmp.eq.s32.totalorder %s24, 1
    %p320 = scmp.ne.s32.totalorder %s315, %s317
    %p321 = scmp.eq.s32.totalorder %s24, 0
    %p322 = por %p320, %p321
    %p323 = scmp.ne.s32.totalorder %s315, %s317
    %p324 = scmp.eq.s32.totalorder %s29, 1
    %p325 = por %p323, %p324
    %p326 = scmp.ne.s32.totalorder %s317, %s318
    %p327 = scmp.eq.s32.totalorder %s29, 0
    %p328 = por %p326, %p327
    %p329 = scmp.ne.s32.totalorder %s317, %s318
    %p330 = scmp.eq.s32.totalorder %s30, 1
    %p331 = por %p329, %p330
    %p333 = scmp.ne.s32.totalorder %s318, %s332
    %p334 = scmp.eq.s32.totalorder %s30, 0
    %p335 = por %p333, %p334
    %s337 = sadd.s32 %s336, 1
    %p340 = scmp.eq.s32.totalorder %s24, 1
    %p341 = scmp.ne.s32.totalorder %s336, %s338
    %p342 = scmp.eq.s32.totalorder %s24, 0
    %p343 = por %p341, %p342
    %p344 = scmp.ne.s32.totalorder %s336, %s338
    %p345 = scmp.eq.s32.totalorder %s29, 1
    %p346 = por %p344, %p345
    %p347 = scmp.ne.s32.totalorder %s338, %s339
    %p348 = scmp.eq.s32.totalorder %s29, 0
    %p349 = por %p347, %p348
    %p350 = scmp.ne.s32.totalorder %s338, %s339
    %p351 = scmp.eq.s32.totalorder %s30, 1
    %p352 = por %p350, %p351
    %p354 = scmp.ne.s32.totalorder %s339, %s353
    %p355 = scmp.eq.s32.totalorder %s30, 0
    %p356 = por %p354, %p355
    %s358 = sadd.s32 %s357, 1
    %p361 = scmp.eq.s32.totalorder %s24, 1
    %p362 = scmp.ne.s32.totalorder %s357, %s359
    %p363 = scmp.eq.s32.totalorder %s24, 0
    %p364 = por %p362, %p363
    %p365 = scmp.ne.s32.totalorder %s357, %s359
    %p366 = scmp.eq.s32.totalorder %s29, 1
    %p367 = por %p365, %p366
    %p368 = scmp.ne.s32.totalorder %s359, %s360
    %p369 = scmp.eq.s32.totalorder %s29, 0
    %p370 = por %p368, %p369
    %p371 = scmp.ne.s32.totalorder %s359, %s360
    %p372 = scmp.eq.s32.totalorder %s30, 1
    %p373 = por %p371, %p372
    %p375 = scmp.ne.s32.totalorder %s360, %s374
    %p376 = scmp.eq.s32.totalorder %s30, 0
    %p377 = por %p375, %p376
    %s378 = ssub.s32 %s24, %s31
    %p379 = scmp.eq.s32.totalorder %s378, 0
    %s381 = sadd.s32 %s380, 1
    %s382 = scalar_select %p379, %s380, %s381
    %p385 = pneg %p379
    %p386 = scmp.eq.s32.totalorder %s24, 1
    %p387 = por %p385, %p386
    %p388 = scmp.ne.s32.totalorder %s380, %s383
    %p389 = scmp.eq.s32.totalorder %s24, 0
    %p390 = por %p388, %p389
    %p391 = scmp.ne.s32.totalorder %s380, %s383
    %p392 = scmp.eq.s32.totalorder %s29, 1
    %p393 = por %p391, %p392
    %p394 = scmp.ne.s32.totalorder %s383, %s384
    %p395 = scmp.eq.s32.totalorder %s29, 0
    %p396 = por %p394, %p395
    %p397 = scmp.ne.s32.totalorder %s383, %s384
    %p398 = scmp.eq.s32.totalorder %s30, 1
    %p399 = por %p397, %p398
    %p401 = scmp.ne.s32.totalorder %s384, %s400
    %p402 = scmp.eq.s32.totalorder %s30, 0
    %p403 = por %p401, %p402
    %s404 = ssub.s32 %s24, %s31
    %p405 = scmp.eq.s32.totalorder %s404, 0
    %s407 = sadd.s32 %s406, 1
    %s408 = scalar_select %p405, %s406, %s407
    %p411 = pneg %p405
    %p412 = scmp.eq.s32.totalorder %s24, 1
    %p413 = por %p411, %p412
    %p414 = scmp.ne.s32.totalorder %s406, %s409
    %p415 = scmp.eq.s32.totalorder %s24, 0
    %p416 = por %p414, %p415
    %p417 = scmp.ne.s32.totalorder %s406, %s409
    %p418 = scmp.eq.s32.totalorder %s29, 1
    %p419 = por %p417, %p418
    %p420 = scmp.ne.s32.totalorder %s409, %s410
    %p421 = scmp.eq.s32.totalorder %s29, 0
    %p422 = por %p420, %p421
    %p423 = scmp.ne.s32.totalorder %s409, %s410
    %p424 = scmp.eq.s32.totalorder %s30, 1
    %p425 = por %p423, %p424
    %p427 = scmp.ne.s32.totalorder %s410, %s426
    %p428 = scmp.eq.s32.totalorder %s30, 0
    %p429 = por %p427, %p428
    %p430 = scmp.le.s32.totalorder 1, %s24
    %p431 = scmp.lt.s32.totalorder %s24, 3
    %p432 = pnand %p430, %p431
    %p433 = pneg %p432
    // Predicated region
    $region9: #{toad_level_vae_forward.1} parent=5 // pred_check
      _
    $region10: #{toad_level_vae_forward.1} parent=5 // pred_check_branch
      %435 = sbr.rel (%p432) target = $region12
    $region11: #{toad_level_vae_forward.1} parent=5 // pred_region
      %s436 = ssub.s32 %s24, 1
      // Predicated region
      $region13: #{toad_level_vae_forward.1} parent=11 // pred_check
        %p437 = pneg %p97
      $region14: #{toad_level_vae_forward.1} parent=11 // pred_check_branch
        %439 = sbr.rel (%p437) target = $region16
      $region15: #{toad_level_vae_forward.1} parent=11 // pred_region
        _
      $region16: #{toad_level_vae_forward.1} parent=11 // pred_fallthru
        _
      // Predicated region
      $region17: #{toad_level_vae_forward.1} parent=11 // pred_check
        %p440 = pneg %p118
      $region18: #{toad_level_vae_forward.1} parent=11 // pred_check_branch
        %442 = sbr.rel (%p440) target = $region20
      $region19: #{toad_level_vae_forward.1} parent=11 // pred_region
        _
      $region20: #{toad_level_vae_forward.1} parent=11 // pred_fallthru
        _
      // Predicated region
      $region21: #{toad_level_vae_forward.1} parent=11 // pred_check
        %p443 = pneg %p139
      $region22: #{toad_level_vae_forward.1} parent=11 // pred_check_branch
        %445 = sbr.rel (%p443) target = $region24
      $region23: #{toad_level_vae_forward.1} parent=11 // pred_region
        _
      $region24: #{toad_level_vae_forward.1} parent=11 // pred_fallthru
        _
      // Predicated region
      $region25: #{toad_level_vae_forward.1} parent=11 // pred_check
        %p446 = pneg %p160
      $region26: #{toad_level_vae_forward.1} parent=11 // pred_check_branch
        %448 = sbr.rel (%p446) target = $region28
      $region27: #{toad_level_vae_forward.1} parent=11 // pred_region
        _
      $region28: #{toad_level_vae_forward.1} parent=11 // pred_fallthru
        _
      // Predicated region
      $region29: #{toad_level_vae_forward.1} parent=11 // pred_check
        %p449 = pneg %p181
      $region30: #{toad_level_vae_forward.1} parent=11 // pred_check_branch
        %451 = sbr.rel (%p449) target = $region32
      $region31: #{toad_level_vae_forward.1} parent=11 // pred_region
        _
      $region32: #{toad_level_vae_forward.1} parent=11 // pred_fallthru
        _
      // Predicated region
      $region33: #{toad_level_vae_forward.1} parent=11 // pred_check
        %p452 = pneg %p202
      $region34: #{toad_level_vae_forward.1} parent=11 // pred_check_branch
        %454 = sbr.rel (%p452) target = $region36
      $region35: #{toad_level_vae_forward.1} parent=11 // pred_region
        _
      $region36: #{toad_level_vae_forward.1} parent=11 // pred_fallthru
        _
      // Predicated region
      $region37: #{toad_level_vae_forward.1} parent=11 // pred_check
        %p455 = pneg %p223
      $region38: #{toad_level_vae_forward.1} parent=11 // pred_check_branch
        %457 = sbr.rel (%p455) target = $region40
      $region39: #{toad_level_vae_forward.1} parent=11 // pred_region
        _
      $region40: #{toad_level_vae_forward.1} parent=11 // pred_fallthru
        _
      // Predicated region
      $region41: #{toad_level_vae_forward.1} parent=11 // pred_check
        %p458 = pneg %p244
      $region42: #{toad_level_vae_forward.1} parent=11 // pred_check_branch
        %460 = sbr.rel (%p458) target = $region44
      $region43: #{toad_level_vae_forward.1} parent=11 // pred_region
        _
      $region44: #{toad_level_vae_forward.1} parent=11 // pred_fallthru
        _
      // Predicated region
      $region45: #{toad_level_vae_forward.1} parent=11 // pred_check
        %p461 = pneg %p265
      $region46: #{toad_level_vae_forward.1} parent=11 // pred_check_branch
        %463 = sbr.rel (%p461) target = $region48
      $region47: #{toad_level_vae_forward.1} parent=11 // pred_region
        _
      $region48: #{toad_level_vae_forward.1} parent=11 // pred_fallthru
        _
      // Predicated region
      $region49: #{toad_level_vae_forward.1} parent=11 // pred_check
        %p464 = pneg %p286
      $region50: #{toad_level_vae_forward.1} parent=11 // pred_check_branch
        %466 = sbr.rel (%p464) target = $region52
      $region51: #{toad_level_vae_forward.1} parent=11 // pred_region
        _
      $region52: #{toad_level_vae_forward.1} parent=11 // pred_fallthru
        _
      // Predicated region
      $region53: #{toad_level_vae_forward.1} parent=11 // pred_check
        %p467 = pneg %p307
      $region54: #{toad_level_vae_forward.1} parent=11 // pred_check_branch
        %469 = sbr.rel (%p467) target = $region56
      $region55: #{toad_level_vae_forward.1} parent=11 // pred_region
        _
      $region56: #{toad_level_vae_forward.1} parent=11 // pred_fallthru
        _
      // Predicated region
      $region57: #{toad_level_vae_forward.1} parent=11 // pred_check
        %p470 = pneg %p328
      $region58: #{toad_level_vae_forward.1} parent=11 // pred_check_branch
        %472 = sbr.rel (%p470) target = $region60
      $region59: #{toad_level_vae_forward.1} parent=11 // pred_region
        _
      $region60: #{toad_level_vae_forward.1} parent=11 // pred_fallthru
        _
      // Predicated region
      $region61: #{toad_level_vae_forward.1} parent=11 // pred_check
        %p473 = pneg %p349
      $region62: #{toad_level_vae_forward.1} parent=11 // pred_check_branch
        %475 = sbr.rel (%p473) target = $region64
      $region63: #{toad_level_vae_forward.1} parent=11 // pred_region
        _
      $region64: #{toad_level_vae_forward.1} parent=11 // pred_fallthru
        _
      // Predicated region
      $region65: #{toad_level_vae_forward.1} parent=11 // pred_check
        %p476 = pneg %p370
      $region66: #{toad_level_vae_forward.1} parent=11 // pred_check_branch
        %478 = sbr.rel (%p476) target = $region68
      $region67: #{toad_level_vae_forward.1} parent=11 // pred_region
        _
      $region68: #{toad_level_vae_forward.1} parent=11 // pred_fallthru
        _
    $region12: #{toad_level_vae_forward.1} parent=5 // pred_fallthru
      _
    %p479 = scmp.lt.s32.totalorder %s24, 2
    // Predicated region
    $region69: #{toad_level_vae_forward.1} parent=5 // pred_check
      %p480 = pneg %p479
    $region70: #{toad_level_vae_forward.1} parent=5 // pred_check_branch
      %482 = sbr.rel (%p480) target = $region72
    $region71: #{toad_level_vae_forward.1} parent=5 // pred_region
      // Predicated region
      $region73: #{toad_level_vae_forward.1} parent=71 // pred_check
        %p483 = pneg %p44
      $region74: #{toad_level_vae_forward.1} parent=71 // pred_check_branch
        %485 = sbr.rel (%p483) target = $region76
      $region75: #{toad_level_vae_forward.1} parent=71 // pred_region
        %p486 = scmp.lt.s32.totalorder %s24, 1
        %s487 = scalar_select %p486, %s24, 1
        %s488 = smul.addr %s487, 2
        %s489 = smul.addr %s488, 8
        %s490 = scalar_lea.vmem %s0, %s489
      $region76: #{toad_level_vae_forward.1} parent=71 // pred_fallthru
        _
      // Predicated region
      $region77: #{toad_level_vae_forward.1} parent=71 // pred_check
        %p491 = pneg %p70
      $region78: #{toad_level_vae_forward.1} parent=71 // pred_check_branch
        %493 = sbr.rel (%p491) target = $region80
      $region79: #{toad_level_vae_forward.1} parent=71 // pred_region
        %p494 = scmp.lt.s32.totalorder %s24, 1
        %s495 = scalar_select %p494, %s24, 1
        %s496 = scalar_lea.vmem %s1, %s495
      $region80: #{toad_level_vae_forward.1} parent=71 // pred_fallthru
        _
    $region72: #{toad_level_vae_forward.1} parent=5 // pred_fallthru
      _
    %p497 = scmp.le.s32.totalorder 1, %s24
    %p498 = scmp.lt.s32.totalorder %s24, 3
    %p499 = pnand %p497, %p498
    %p500 = pneg %p499
    // Predicated region
    $region81: #{toad_level_vae_forward.1} parent=5 // pred_check
      _
    $region82: #{toad_level_vae_forward.1} parent=5 // pred_check_branch
      %502 = sbr.rel (%p499) target = $region84
    $region83: #{toad_level_vae_forward.1} parent=5 // pred_region
      %s503 = ssub.s32 %s24, 1
      %p504 = scmp.lt.s32.totalorder %s29, 1
      %s505 = scalar_select %p504, %s29, 1
      %s506 = smul.addr %s505, 2
      %s507 = smul.addr %s506, 8
      %s508 = scalar_lea.vmem %s0, %s507
      %p509 = pneg %p50
      %p510 = pneg %p47
      %p511 = scmp.lt.s32.totalorder %s29, 1
      %s512 = scalar_select %p511, %s29, 1
      %s513 = scalar_lea.vmem %s1, %s512
      %p514 = pneg %p76
      %p515 = pneg %p73
      %p516 = pneg %p97
      %p517 = pneg %p94
      %p518 = pneg %p118
      %p519 = pneg %p115
      %p520 = pneg %p139
      %p521 = pneg %p136
      %p522 = pneg %p160
      %p523 = pneg %p157
      %p524 = pneg %p181
      %p525 = pneg %p178
      %p526 = pneg %p202
      %p527 = pneg %p199
      %p528 = pneg %p223
      %p529 = pneg %p220
      %p530 = pneg %p244
      %p531 = pneg %p241
      %p532 = pneg %p265
      %p533 = pneg %p262
      %p534 = pneg %p286
      %p535 = pneg %p283
      %p536 = pneg %p307
      %p537 = pneg %p304
      %p538 = pneg %p328
      %p539 = pneg %p325
      %p540 = pneg %p349
      %p541 = pneg %p346
      %p542 = pneg %p370
      %p543 = pneg %p367
      %p544 = pneg %p396
      %p545 = pneg %p393
      %p546 = scmp.lt.s32.totalorder %s29, 1
      %s547 = scalar_select %p546, %s29, 1
      %s548 = smul.addr %s547, 2
      %s549 = smul.addr %s548, 8
      %s550 = scalar_lea.vmem %s16, %s549
      %p551 = pneg %p422
      %p552 = pneg %p419
      %p553 = scmp.lt.s32.totalorder %s29, 1
      %s554 = scalar_select %p553, %s29, 1
      %s555 = scalar_lea.vmem %s17, %s554
      %p556 = scmp.lt.s32.totalorder %s29, 1
      %s557 = scalar_select %p556, %s29, 1
      %s558 = smul.addr %s557, 2
      %s559 = smul.addr %s558, 8
      %s560 = scalar_lea.vmem %s0, %s559
      %p561 = scmp.lt.s32.totalorder %s29, 1
      %s562 = scalar_select %p561, %s29, 1
      %s563 = scalar_lea.vmem %s1, %s562
      %p564 = scmp.lt.s32.totalorder %s29, 1
      %s565 = scalar_select %p564, %s29, 1
      %s566 = smul.addr %s565, 2
      %s567 = smul.addr %s566, 8
      %s568 = scalar_lea.vmem %s16, %s567
      %p569 = scmp.lt.s32.totalorder %s29, 1
      %s570 = scalar_select %p569, %s29, 1
      %s571 = scalar_lea.vmem %s17, %s570
      %v572 = vld [vmem:[%s560] sm:$0xff]
      %v573 = vld [vmem:[%s560 + $0x8] sm:$0xff]
      %v574 = vld [vmem:[%s2] sm:$0xff]
      %v575 = vld [vmem:[%s2 + $0x8] sm:$0xff]
      %v576 = vld [vmem:[%s2 + $0x10] sm:$0xff]
      %v577 = vld [vmem:[%s2 + $0x18] sm:$0xff]
      %v578 = vld [vmem:[%s2 + $0x20] sm:$0xff]
      %v579 = vld [vmem:[%s2 + $0x28] sm:$0xff]
      %v580 = vld [vmem:[%s2 + $0x30] sm:$0xff]
      %v581 = vld [vmem:[%s2 + $0x38] sm:$0xff]
      %v582 = vld [vmem:[%s2 + $0x40] sm:$0xff]
      %v583 = vld [vmem:[%s2 + $0x48] sm:$0xff]
      %v584 = vld [vmem:[%s2 + $0x50] sm:$0xff]
      %v585 = vld [vmem:[%s2 + $0x58] sm:$0xff]
      %v586 = vld [vmem:[%s2 + $0x60] sm:$0xff]
      %v587 = vld [vmem:[%s2 + $0x68] sm:$0xff]
      %v588 = vld [vmem:[%s2 + $0x70] sm:$0xff]
      %v589 = vld [vmem:[%s2 + $0x78] sm:$0xff]
      %s590 = scalar_lea.vmem %s2, 128
      %v591 = vld [vmem:[%s590] sm:$0xff]
      %v592 = vld [vmem:[%s590 + $0x8] sm:$0xff]
      %v593 = vld [vmem:[%s590 + $0x10] sm:$0xff]
      %v594 = vld [vmem:[%s590 + $0x18] sm:$0xff]
      %v595 = vld [vmem:[%s590 + $0x20] sm:$0xff]
      %v596 = vld [vmem:[%s590 + $0x28] sm:$0xff]
      %v597 = vld [vmem:[%s590 + $0x30] sm:$0xff]
      %v598 = vld [vmem:[%s590 + $0x38] sm:$0xff]
      %v599 = vld [vmem:[%s590 + $0x40] sm:$0xff]
      %v600 = vld [vmem:[%s590 + $0x48] sm:$0xff]
      %v601 = vld [vmem:[%s590 + $0x50] sm:$0xff]
      %v602 = vld [vmem:[%s590 + $0x58] sm:$0xff]
      %v603 = vld [vmem:[%s590 + $0x60] sm:$0xff]
      %v604 = vld [vmem:[%s590 + $0x68] sm:$0xff]
      %v605 = vld [vmem:[%s590 + $0x70] sm:$0xff]
      %v606 = vld [vmem:[%s590 + $0x78] sm:$0xff]
      %vm609 = vcmask 1046528
      %v610 = vrot.slane %v572, 1
      %v611 = vrot.slane %v573, 1
      %v612 = vsel %vm609, %v610, %v611
      %vm613 = vcmask 523264
      %v614 = vsel %vm613, %v612, 0
      %v616 = vsel %vm613, %v611, 0
      %618 = vmatpush.msra.mxu0 0.0
      %619 = vmatpush.msra.mxu0 0.0
      %620 = vmatpush.msra.mxu0 0.0
      %621 = vmatpush.msra.mxu0 0.0
      %622 = vmatpush.msra.mxu0 0.0
      %623 = vmatpush.msra.mxu0 0.0
      %624 = vmatpush.msra.mxu0 0.0
      %625 = vmatpush.msra.mxu0 0.0
      %626 = vmatpush.msra.mxu0 %v605
      %627 = vmatpush.msra.mxu0 %v603
      %628 = vmatpush.msra.mxu0 %v601
      %629 = vmatpush.msra.mxu0 %v599
      %630 = vmatpush.msra.mxu0 %v597
      %631 = vmatpush.msra.mxu0 %v595
      %632 = vmatpush.msra.mxu0 %v593
      %633 = vmatpush.msra.mxu0 %v591
      %634 = vmatmul.f32.gmra.mxu0 %v614
      %v635 = vpop.f32.mrf.mxu0
      %v636 = vadd.f32 0.0, %v635
      %637 = vmatmul.f32.gmra.mxu0 %v616
      %v638 = vpop.f32.mrf.mxu0
      %v639 = vadd.f32 0.0, %v638
      %640 = vdwg.mxu0
      %641 = vmatpush.msra.mxu0 0.0
      %642 = vmatpush.msra.mxu0 0.0
      %643 = vmatpush.msra.mxu0 0.0
      %644 = vmatpush.msra.mxu0 0.0
      %645 = vmatpush.msra.mxu0 0.0
      %646 = vmatpush.msra.mxu0 0.0
      %647 = vmatpush.msra.mxu0 0.0
      %648 = vmatpush.msra.mxu0 0.0
      %649 = vmatpush.msra.mxu0 %v606
      %650 = vmatpush.msra.mxu0 %v604
      %651 = vmatpush.msra.mxu0 %v602
      %652 = vmatpush.msra.mxu0 %v600
      %653 = vmatpush.msra.mxu0 %v598
      %654 = vmatpush.msra.mxu0 %v596
      %655 = vmatpush.msra.mxu0 %v594
      %656 = vmatpush.msra.mxu0 %v592
      %657 = vmatmul.f32.gmra.mxu0 %v614
      %v658 = vpop.f32.mrf.mxu0
      %v659 = vadd.f32 0.0, %v658
      %660 = vmatmul.f32.gmra.mxu0 %v616
      %v661 = vpop.f32.mrf.mxu0
      %v662 = vadd.f32 0.0, %v661
      %663 = vdwg.mxu0
      %v664 = vsel %vm613, %v572, 0
      %v666 = vsel %vm613, %v573, 0
      %668 = vmatpush.msra.mxu0 0.0
      %669 = vmatpush.msra.mxu0 0.0
      %670 = vmatpush.msra.mxu0 0.0
      %671 = vmatpush.msra.mxu0 0.0
      %672 = vmatpush.msra.mxu0 0.0
      %673 = vmatpush.msra.mxu0 0.0
      %674 = vmatpush.msra.mxu0 0.0
      %675 = vmatpush.msra.mxu0 0.0
      %676 = vmatpush.msra.mxu0 %v588
      %677 = vmatpush.msra.mxu0 %v586
      %678 = vmatpush.msra.mxu0 %v584
      %679 = vmatpush.msra.mxu0 %v582
      %680 = vmatpush.msra.mxu0 %v580
      %681 = vmatpush.msra.mxu0 %v578
      %682 = vmatpush.msra.mxu0 %v576
      %683 = vmatpush.msra.mxu0 %v574
      %684 = vmatmul.f32.gmra.mxu0 %v664
      %v685 = vpop.f32.mrf.mxu0
      %v686 = vadd.f32 %v636, %v685
      %687 = vmatmul.f32.gmra.mxu0 %v666
      %v688 = vpop.f32.mrf.mxu0
      %v689 = vadd.f32 %v639, %v688
      %690 = vdwg.mxu0
      %691 = vmatpush.msra.mxu0 0.0
      %692 = vmatpush.msra.mxu0 0.0
      %693 = vmatpush.msra.mxu0 0.0
      %694 = vmatpush.msra.mxu0 0.0
      %695 = vmatpush.msra.mxu0 0.0
      %696 = vmatpush.msra.mxu0 0.0
      %697 = vmatpush.msra.mxu0 0.0
      %698 = vmatpush.msra.mxu0 0.0
      %699 = vmatpush.msra.mxu0 %v589
      %700 = vmatpush.msra.mxu0 %v587
      %701 = vmatpush.msra.mxu0 %v585
      %702 = vmatpush.msra.mxu0 %v583
      %703 = vmatpush.msra.mxu0 %v581
      %704 = vmatpush.msra.mxu0 %v579
      %705 = vmatpush.msra.mxu0 %v577
      %706 = vmatpush.msra.mxu0 %v575
      %707 = vmatmul.f32.gmra.mxu0 %v664
      %v708 = vpop.f32.mrf.mxu0
      %v709 = vadd.f32 %v659, %v708
      %710 = vmatmul.f32.gmra.mxu0 %v666
      %v711 = vpop.f32.mrf.mxu0
      %v712 = vadd.f32 %v662, %v711
      %713 = vdwg.mxu0
      %s714 = scalar_lea.vmem %s2, 256
      %v715 = vld [vmem:[%s714] sm:$0xff]
      %v716 = vld [vmem:[%s714 + $0x8] sm:$0xff]
      %v717 = vld [vmem:[%s714 + $0x10] sm:$0xff]
      %v718 = vld [vmem:[%s714 + $0x18] sm:$0xff]
      %v719 = vld [vmem:[%s714 + $0x20] sm:$0xff]
      %v720 = vld [vmem:[%s714 + $0x28] sm:$0xff]
      %v721 = vld [vmem:[%s714 + $0x30] sm:$0xff]
      %v722 = vld [vmem:[%s714 + $0x38] sm:$0xff]
      %v723 = vld [vmem:[%s714 + $0x40] sm:$0xff]
      %v724 = vld [vmem:[%s714 + $0x48] sm:$0xff]
      %v725 = vld [vmem:[%s714 + $0x50] sm:$0xff]
      %v726 = vld [vmem:[%s714 + $0x58] sm:$0xff]
      %v727 = vld [vmem:[%s714 + $0x60] sm:$0xff]
      %v728 = vld [vmem:[%s714 + $0x68] sm:$0xff]
      %v729 = vld [vmem:[%s714 + $0x70] sm:$0xff]
      %v730 = vld [vmem:[%s714 + $0x78] sm:$0xff]
      %vm731 = vcmask 1045504
      %v732 = vrot.slane %v572, 2
      %v733 = vrot.slane %v573, 2
      %v734 = vsel %vm731, %v732, %v733
      %v735 = vsel %vm613, %v734, 0
      %v737 = vsel %vm613, %v733, 0
      %739 = vmatpush.msra.mxu0 0.0
      %740 = vmatpush.msra.mxu0 0.0
      %741 = vmatpush.msra.mxu0 0.0
      %742 = vmatpush.msra.mxu0 0.0
      %743 = vmatpush.msra.mxu0 0.0
      %744 = vmatpush.msra.mxu0 0.0
      %745 = vmatpush.msra.mxu0 0.0
      %746 = vmatpush.msra.mxu0 0.0
      %747 = vmatpush.msra.mxu0 %v729
      %748 = vmatpush.msra.mxu0 %v727
      %749 = vmatpush.msra.mxu0 %v725
      %750 = vmatpush.msra.mxu0 %v723
      %751 = vmatpush.msra.mxu0 %v721
      %752 = vmatpush.msra.mxu0 %v719
      %753 = vmatpush.msra.mxu0 %v717
      %754 = vmatpush.msra.mxu0 %v715
      %755 = vmatmul.f32.gmra.mxu0 %v735
      %v756 = vpop.f32.mrf.mxu0
      %v757 = vadd.f32 0.0, %v756
      %758 = vmatmul.f32.gmra.mxu0 %v737
      %v759 = vpop.f32.mrf.mxu0
      %v760 = vadd.f32 0.0, %v759
      %761 = vdwg.mxu0
      %762 = vmatpush.msra.mxu0 0.0
      %763 = vmatpush.msra.mxu0 0.0
      %764 = vmatpush.msra.mxu0 0.0
      %765 = vmatpush.msra.mxu0 0.0
      %766 = vmatpush.msra.mxu0 0.0
      %767 = vmatpush.msra.mxu0 0.0
      %768 = vmatpush.msra.mxu0 0.0
      %769 = vmatpush.msra.mxu0 0.0
      %770 = vmatpush.msra.mxu0 %v730
      %771 = vmatpush.msra.mxu0 %v728
      %772 = vmatpush.msra.mxu0 %v726
      %773 = vmatpush.msra.mxu0 %v724
      %774 = vmatpush.msra.mxu0 %v722
      %775 = vmatpush.msra.mxu0 %v720
      %776 = vmatpush.msra.mxu0 %v718
      %777 = vmatpush.msra.mxu0 %v716
      %778 = vmatmul.f32.gmra.mxu0 %v735
      %v779 = vpop.f32.mrf.mxu0
      %v780 = vadd.f32 0.0, %v779
      %781 = vmatmul.f32.gmra.mxu0 %v737
      %v782 = vpop.f32.mrf.mxu0
      %v783 = vadd.f32 0.0, %v782
      %784 = vdwg.mxu0
      %v785 = vadd.f32 %v686, %v757
      %v786 = vadd.f32 %v709, %v780
      %v787 = vadd.f32 %v689, %v760
      %v788 = vadd.f32 %v712, %v783
      %v789 = vld [vmem:[%s3] sm:$0x3]
      %v791 = vperm.slane %v789, 0
      %v792 = vperm.slane %v789, 1
      %v795 = vadd.f32 %v785, %v791
      %v796 = vadd.f32 %v786, %v792
      %v797 = vadd.f32 %v787, %v791
      %v798 = vadd.f32 %v788, %v792
      %v799 = vmax.f32 %v795, 0.0
      %v800 = vmax.f32 %v796, 0.0
      %v801 = vmax.f32 %v797, 0.0
      %v802 = vmax.f32 %v798, 0.0
      %v803 = vld [vmem:[%s4] sm:$0xff]
      %v804 = vld [vmem:[%s4 + $0x8] sm:$0xff]
      %v805 = vld [vmem:[%s4 + $0x10] sm:$0xff]
      %v806 = vld [vmem:[%s4 + $0x18] sm:$0xff]
      %v807 = vld [vmem:[%s4 + $0x20] sm:$0xff]
      %v808 = vld [vmem:[%s4 + $0x28] sm:$0xff]
      %v809 = vld [vmem:[%s4 + $0x30] sm:$0xff]
      %v810 = vld [vmem:[%s4 + $0x38] sm:$0xff]
      %v811 = vld [vmem:[%s4 + $0x40] sm:$0xff]
      %v812 = vld [vmem:[%s4 + $0x48] sm:$0xff]
      %v813 = vld [vmem:[%s4 + $0x50] sm:$0xff]
      %v814 = vld [vmem:[%s4 + $0x58] sm:$0xff]
      %v815 = vld [vmem:[%s4 + $0x60] sm:$0xff]
      %v816 = vld [vmem:[%s4 + $0x68] sm:$0xff]
      %v817 = vld [vmem:[%s4 + $0x70] sm:$0xff]
      %v818 = vld [vmem:[%s4 + $0x78] sm:$0xff]
      %v819 = vld [vmem:[%s4 + $0x80] sm:$0xff]
      %v820 = vld [vmem:[%s4 + $0x88] sm:$0xff]
      %v821 = vld [vmem:[%s4 + $0x90] sm:$0xff]
      %v822 = vld [vmem:[%s4 + $0x98] sm:$0xff]
      %v823 = vld [vmem:[%s4 + $0xa0] sm:$0xff]
      %v824 = vld [vmem:[%s4 + $0xa8] sm:$0xff]
      %v825 = vld [vmem:[%s4 + $0xb0] sm:$0xff]
      %v826 = vld [vmem:[%s4 + $0xb8] sm:$0xff]
      %v827 = vld [vmem:[%s4 + $0xc0] sm:$0xff]
      %v828 = vld [vmem:[%s4 + $0xc8] sm:$0xff]
      %v829 = vld [vmem:[%s4 + $0xd0] sm:$0xff]
      %v830 = vld [vmem:[%s4 + $0xd8] sm:$0xff]
      %s831 = scalar_lea.vmem %s4, 224
      %v832 = vld [vmem:[%s831] sm:$0xff]
      %v833 = vld [vmem:[%s831 + $0x8] sm:$0xff]
      %v834 = vld [vmem:[%s831 + $0x10] sm:$0xff]
      %v835 = vld [vmem:[%s831 + $0x18] sm:$0xff]
      %v836 = vld [vmem:[%s831 + $0x20] sm:$0xff]
      %v837 = vld [vmem:[%s831 + $0x28] sm:$0xff]
      %v838 = vld [vmem:[%s831 + $0x30] sm:$0xff]
      %v839 = vld [vmem:[%s831 + $0x38] sm:$0xff]
      %v840 = vld [vmem:[%s831 + $0x40] sm:$0xff]
      %v841 = vld [vmem:[%s831 + $0x48] sm:$0xff]
      %v842 = vld [vmem:[%s831 + $0x50] sm:$0xff]
      %v843 = vld [vmem:[%s831 + $0x58] sm:$0xff]
      %v844 = vld [vmem:[%s831 + $0x60] sm:$0xff]
      %v845 = vld [vmem:[%s831 + $0x68] sm:$0xff]
      %v846 = vld [vmem:[%s831 + $0x70] sm:$0xff]
      %v847 = vld [vmem:[%s831 + $0x78] sm:$0xff]
      %v848 = vld [vmem:[%s831 + $0x80] sm:$0xff]
      %v849 = vld [vmem:[%s831 + $0x88] sm:$0xff]
      %v850 = vld [vmem:[%s831 + $0x90] sm:$0xff]
      %v851 = vld [vmem:[%s831 + $0x98] sm:$0xff]
      %v852 = vld [vmem:[%s831 + $0xa0] sm:$0xff]
      %v853 = vld [vmem:[%s831 + $0xa8] sm:$0xff]
      %v854 = vld [vmem:[%s831 + $0xb0] sm:$0xff]
      %v855 = vld [vmem:[%s831 + $0xb8] sm:$0xff]
      %v856 = vld [vmem:[%s831 + $0xc0] sm:$0xff]
      %v857 = vld [vmem:[%s831 + $0xc8] sm:$0xff]
      %v858 = vld [vmem:[%s831 + $0xd0] sm:$0xff]
      %v859 = vld [vmem:[%s831 + $0xd8] sm:$0xff]
      %v864 = vrot.slane %v799, 1
      %v865 = vrot.slane %v801, 1
      %v866 = vsel %vm609, %v864, %v865
      %v867 = vrot.slane %v800, 1
      %v868 = vrot.slane %v802, 1
      %v869 = vsel %vm609, %v867, %v868
      %vm872 = vcmask 785408
      %v873 = vsel %vm872, %v869, 0
      %v875 = vsel %vm872, %v868, 0
      %877 = vmatpush.msra.mxu0 %v847
      %878 = vmatpush.msra.mxu0 %v846
      %879 = vmatpush.msra.mxu0 %v845
      %880 = vmatpush.msra.mxu0 %v844
      %881 = vmatpush.msra.mxu0 %v843
      %882 = vmatpush.msra.mxu0 %v842
      %883 = vmatpush.msra.mxu0 %v841
      %884 = vmatpush.msra.mxu0 %v840
      %885 = vmatpush.msra.mxu0 %v839
      %886 = vmatpush.msra.mxu0 %v838
      %887 = vmatpush.msra.mxu0 %v837
      %888 = vmatpush.msra.mxu0 %v836
      %889 = vmatpush.msra.mxu0 %v835
      %890 = vmatpush.msra.mxu0 %v834
      %891 = vmatpush.msra.mxu0 %v833
      %892 = vmatpush.msra.mxu0 %v832
      %893 = vmatmul.f32.gmra.mxu0 %v866
      %v894 = vpop.f32.mrf.mxu0
      %v895 = vadd.f32 0.0, %v894
      %896 = vmatmul.f32.gmra.mxu0 %v865
      %v897 = vpop.f32.mrf.mxu0
      %v898 = vadd.f32 0.0, %v897
      %899 = vdwg.mxu0
      %900 = vmatpush.msra.mxu0 0.0
      %901 = vmatpush.msra.mxu0 0.0
      %902 = vmatpush.msra.mxu0 0.0
      %903 = vmatpush.msra.mxu0 0.0
      %904 = vmatpush.msra.mxu0 %v859
      %905 = vmatpush.msra.mxu0 %v858
      %906 = vmatpush.msra.mxu0 %v857
      %907 = vmatpush.msra.mxu0 %v856
      %908 = vmatpush.msra.mxu0 %v855
      %909 = vmatpush.msra.mxu0 %v854
      %910 = vmatpush.msra.mxu0 %v853
      %911 = vmatpush.msra.mxu0 %v852
      %912 = vmatpush.msra.mxu0 %v851
      %913 = vmatpush.msra.mxu0 %v850
      %914 = vmatpush.msra.mxu0 %v849
      %915 = vmatpush.msra.mxu0 %v848
      %916 = vmatmul.f32.gmra.mxu0 %v873
      %v917 = vpop.f32.mrf.mxu0
      %v918 = vadd.f32 %v895, %v917
      %919 = vmatmul.f32.gmra.mxu0 %v875
      %v920 = vpop.f32.mrf.mxu0
      %v921 = vadd.f32 %v898, %v920
      %922 = vdwg.mxu0
      %v923 = vsel %vm872, %v800, 0
      %v925 = vsel %vm872, %v802, 0
      %927 = vmatpush.msra.mxu0 %v818
      %928 = vmatpush.msra.mxu0 %v817
      %929 = vmatpush.msra.mxu0 %v816
      %930 = vmatpush.msra.mxu0 %v815
      %931 = vmatpush.msra.mxu0 %v814
      %932 = vmatpush.msra.mxu0 %v813
      %933 = vmatpush.msra.mxu0 %v812
      %934 = vmatpush.msra.mxu0 %v811
      %935 = vmatpush.msra.mxu0 %v810
      %936 = vmatpush.msra.mxu0 %v809
      %937 = vmatpush.msra.mxu0 %v808
      %938 = vmatpush.msra.mxu0 %v807
      %939 = vmatpush.msra.mxu0 %v806
      %940 = vmatpush.msra.mxu0 %v805
      %941 = vmatpush.msra.mxu0 %v804
      %942 = vmatpush.msra.mxu0 %v803
      %943 = vmatmul.f32.gmra.mxu0 %v799
      %v944 = vpop.f32.mrf.mxu0
      %v945 = vadd.f32 %v918, %v944
      %946 = vmatmul.f32.gmra.mxu0 %v801
      %v947 = vpop.f32.mrf.mxu0
      %v948 = vadd.f32 %v921, %v947
      %949 = vdwg.mxu0
      %950 = vmatpush.msra.mxu0 0.0
      %951 = vmatpush.msra.mxu0 0.0
      %952 = vmatpush.msra.mxu0 0.0
      %953 = vmatpush.msra.mxu0 0.0
      %954 = vmatpush.msra.mxu0 %v830
      %955 = vmatpush.msra.mxu0 %v829
      %956 = vmatpush.msra.mxu0 %v828
      %957 = vmatpush.msra.mxu0 %v827
      %958 = vmatpush.msra.mxu0 %v826
      %959 = vmatpush.msra.mxu0 %v825
      %960 = vmatpush.msra.mxu0 %v824
      %961 = vmatpush.msra.mxu0 %v823
      %962 = vmatpush.msra.mxu0 %v822
      %963 = vmatpush.msra.mxu0 %v821
      %964 = vmatpush.msra.mxu0 %v820
      %965 = vmatpush.msra.mxu0 %v819
      %966 = vmatmul.f32.gmra.mxu0 %v923
      %v967 = vpop.f32.mrf.mxu0
      %v968 = vadd.f32 %v945, %v967
      %969 = vmatmul.f32.gmra.mxu0 %v925
      %v970 = vpop.f32.mrf.mxu0
      %v971 = vadd.f32 %v948, %v970
      %972 = vdwg.mxu0
      %s973 = scalar_lea.vmem %s4, 448
      %v974 = vld [vmem:[%s973] sm:$0xff]
      %v975 = vld [vmem:[%s973 + $0x8] sm:$0xff]
      %v976 = vld [vmem:[%s973 + $0x10] sm:$0xff]
      %v977 = vld [vmem:[%s973 + $0x18] sm:$0xff]
      %v978 = vld [vmem:[%s973 + $0x20] sm:$0xff]
      %v979 = vld [vmem:[%s973 + $0x28] sm:$0xff]
      %v980 = vld [vmem:[%s973 + $0x30] sm:$0xff]
      %v981 = vld [vmem:[%s973 + $0x38] sm:$0xff]
      %v982 = vld [vmem:[%s973 + $0x40] sm:$0xff]
      %v983 = vld [vmem:[%s973 + $0x48] sm:$0xff]
      %v984 = vld [vmem:[%s973 + $0x50] sm:$0xff]
      %v985 = vld [vmem:[%s973 + $0x58] sm:$0xff]
      %v986 = vld [vmem:[%s973 + $0x60] sm:$0xff]
      %v987 = vld [vmem:[%s973 + $0x68] sm:$0xff]
      %v988 = vld [vmem:[%s973 + $0x70] sm:$0xff]
      %v989 = vld [vmem:[%s973 + $0x78] sm:$0xff]
      %v990 = vld [vmem:[%s973 + $0x80] sm:$0xff]
      %v991 = vld [vmem:[%s973 + $0x88] sm:$0xff]
      %v992 = vld [vmem:[%s973 + $0x90] sm:$0xff]
      %v993 = vld [vmem:[%s973 + $0x98] sm:$0xff]
      %v994 = vld [vmem:[%s973 + $0xa0] sm:$0xff]
      %v995 = vld [vmem:[%s973 + $0xa8] sm:$0xff]
      %v996 = vld [vmem:[%s973 + $0xb0] sm:$0xff]
      %v997 = vld [vmem:[%s973 + $0xb8] sm:$0xff]
      %v998 = vld [vmem:[%s973 + $0xc0] sm:$0xff]
      %v999 = vld [vmem:[%s973 + $0xc8] sm:$0xff]
      %v1000 = vld [vmem:[%s973 + $0xd0] sm:$0xff]
      %v1001 = vld [vmem:[%s973 + $0xd8] sm:$0xff]
      %v1002 = vrot.slane %v799, 2
      %v1003 = vrot.slane %v801, 2
      %v1004 = vsel %vm731, %v1002, %v1003
      %v1005 = vrot.slane %v800, 2
      %v1006 = vrot.slane %v802, 2
      %v1007 = vsel %vm731, %v1005, %v1006
      %v1010 = vsel %vm872, %v1007, 0
      %v1012 = vsel %vm872, %v1006, 0
      %1014 = vmatpush.msra.mxu0 %v989
      %1015 = vmatpush.msra.mxu0 %v988
      %1016 = vmatpush.msra.mxu0 %v987
      %1017 = vmatpush.msra.mxu0 %v986
      %1018 = vmatpush.msra.mxu0 %v985
      %1019 = vmatpush.msra.mxu0 %v984
      %1020 = vmatpush.msra.mxu0 %v983
      %1021 = vmatpush.msra.mxu0 %v982
      %1022 = vmatpush.msra.mxu0 %v981
      %1023 = vmatpush.msra.mxu0 %v980
      %1024 = vmatpush.msra.mxu0 %v979
      %1025 = vmatpush.msra.mxu0 %v978
      %1026 = vmatpush.msra.mxu0 %v977
      %1027 = vmatpush.msra.mxu0 %v976
      %1028 = vmatpush.msra.mxu0 %v975
      %1029 = vmatpush.msra.mxu0 %v974
      %1030 = vmatmul.f32.gmra.mxu0 %v1004
      %v1031 = vpop.f32.mrf.mxu0
      %v1032 = vadd.f32 0.0, %v1031
      %1033 = vmatmul.f32.gmra.mxu0 %v1003
      %v1034 = vpop.f32.mrf.mxu0
      %v1035 = vadd.f32 0.0, %v1034
      %1036 = vdwg.mxu0
      %1037 = vmatpush.msra.mxu0 0.0
      %1038 = vmatpush.msra.mxu0 0.0
      %1039 = vmatpush.msra.mxu0 0.0
      %1040 = vmatpush.msra.mxu0 0.0
      %1041 = vmatpush.msra.mxu0 %v1001
      %1042 = vmatpush.msra.mxu0 %v1000
      %1043 = vmatpush.msra.mxu0 %v999
      %1044 = vmatpush.msra.mxu0 %v998
      %1045 = vmatpush.msra.mxu0 %v997
      %1046 = vmatpush.msra.mxu0 %v996
      %1047 = vmatpush.msra.mxu0 %v995
      %1048 = vmatpush.msra.mxu0 %v994
      %1049 = vmatpush.msra.mxu0 %v993
      %1050 = vmatpush.msra.mxu0 %v992
      %1051 = vmatpush.msra.mxu0 %v991
      %1052 = vmatpush.msra.mxu0 %v990
      %1053 = vmatmul.f32.gmra.mxu0 %v1010
      %v1054 = vpop.f32.mrf.mxu0
      %v1055 = vadd.f32 %v1032, %v1054
      %1056 = vmatmul.f32.gmra.mxu0 %v1012
      %v1057 = vpop.f32.mrf.mxu0
      %v1058 = vadd.f32 %v1035, %v1057
      %1059 = vdwg.mxu0
      %v1060 = vadd.f32 %v968, %v1055
      %v1061 = vadd.f32 %v971, %v1058
      %v1062 = vld [vmem:[%s5] sm:$0x1]
      %v1064 = vperm.slane %v1062, 0
      %v1066 = vadd.f32 %v1060, %v1064
      %v1067 = vadd.f32 %v1061, %v1064
      %v1068 = vmax.f32 %v1066, 0.0
      %v1069 = vmax.f32 %v1067, 0.0
      %v1070 = vlaneseq
      %vm1071 = vcmp.ge.s32.totalorder %v1070, 0
      %vm1072 = vcmp.lt.s32.totalorder %v1070, 48
      %vm1073 = vmand %vm1071, %vm1072
      %1074 = vst.msk [vmem:[#allocation2] sm:$0x1] %vm1073, %v1068
      %1076 = vst [vmem:[#allocation1] sm:$0xff] %v1068
      %s1077 = scalar_lea.vmem [#allocation1], 1
      %v1078 = vld [vmem:[%s1077] ss:$9 sm:$0xff]
      %1079 = vrot.lane.b32.xlu0 %v1078, 48
      %v1080 = vpop.permute.xlu0 %1079
      %vm1082 = vcmp.ge.s32.totalorder %v1070, 48
      %vm1083 = vcmp.lt.s32.totalorder %v1070, 96
      %vm1084 = vmand %vm1082, %vm1083
      %1085 = vst.msk [vmem:[#allocation2] sm:$0x1] %vm1084, %v1080
      %1086 = vst [vmem:[#allocation1] sm:$0xff] %v1068
      %s1087 = scalar_lea.vmem [#allocation1], 2
      %v1088 = vld [vmem:[%s1087] ss:$9 sm:$0xff]
      %1089 = vrot.lane.b32.xlu0 %v1088, 96
      %v1090 = vpop.permute.xlu0 %1089
      %v1091 = vrot.slane %v1090, 7
      %v1092 = vsel %vm872, %v1091, %v1090
      %vm1094 = vcmp.ge.s32.totalorder %v1070, 96
      %vm1095 = vcmp.lt.s32.totalorder %v1070, 144
      %vm1096 = vmand %vm1094, %vm1095
      %1097 = vst.msk [vmem:[#allocation2] sm:$0x3] %vm1096, %v1092
      %1098 = vst [vmem:[#allocation1] sm:$0xff] %v1068
      %s1099 = scalar_lea.vmem [#allocation1], 3
      %v1100 = vld [vmem:[%s1099] ss:$9 sm:$0xff]
      %1101 = vrot.lane.b32.xlu0 %v1100, 16
      %v1102 = vpop.permute.xlu0 %1101
      %vm1104 = vcmp.ge.s32.totalorder %v1070, 16
      %vm1105 = vcmp.lt.s32.totalorder %v1070, 64
      %vm1106 = vmand %vm1104, %vm1105
      %1107 = vst.msk [vmem:[#allocation2 + $0x1] sm:$0x1] %vm1106, %v1102
      %1108 = vst [vmem:[#allocation1] sm:$0xff] %v1068
      %s1109 = scalar_lea.vmem [#allocation1], 4
      %v1110 = vld [vmem:[%s1109] ss:$9 sm:$0xff]
      %1111 = vrot.lane.b32.xlu0 %v1110, 64
      %v1112 = vpop.permute.xlu0 %1111
      %vm1114 = vcmp.ge.s32.totalorder %v1070, 64
      %vm1115 = vcmp.lt.s32.totalorder %v1070, 112
      %vm1116 = vmand %vm1114, %vm1115
      %1117 = vst.msk [vmem:[#allocation2 + $0x1] sm:$0x1] %vm1116, %v1112
      %1118 = vst [vmem:[#allocation1] sm:$0xff] %v1068
      %s1119 = scalar_lea.vmem [#allocation1], 5
      %v1120 = vld [vmem:[%s1119] ss:$9 sm:$0xff]
      %1121 = vrot.lane.b32.xlu0 %v1120, 112
      %v1122 = vpop.permute.xlu0 %1121
      %v1123 = vrot.slane %v1122, 7
      %vm1124 = vcmask 916480
      %v1125 = vsel %vm1124, %v1123, %v1122
      %vm1127 = vcmp.ge.s32.totalorder %v1070, 112
      %vm1128 = vcmp.lt.s32.totalorder %v1070, 160
      %vm1129 = vmand %vm1127, %vm1128
      %1130 = vst.msk [vmem:[#allocation2 + $0x1] sm:$0x3] %vm1129, %v1125
      %1131 = vst [vmem:[#allocation1] sm:$0xff] %v1068
      %s1132 = scalar_lea.vmem [#allocation1], 6
      %v1133 = vld [vmem:[%s1132] ss:$9 sm:$0xff]
      %1134 = vrot.lane.b32.xlu0 %v1133, 32
      %v1135 = vpop.permute.xlu0 %1134
      %vm1137 = vcmp.ge.s32.totalorder %v1070, 32
      %vm1138 = vcmp.lt.s32.totalorder %v1070, 80
      %vm1139 = vmand %vm1137, %vm1138
      %1140 = vst.msk [vmem:[#allocation2 + $0x2] sm:$0x1] %vm1139, %v1135
      %1141 = vst [vmem:[#allocation1] sm:$0xff] %v1068
      %s1142 = scalar_lea.vmem [#allocation1], 7
      %v1143 = vld [vmem:[%s1142] ss:$9 sm:$0xff]
      %1144 = vrot.lane.b32.xlu0 %v1143, 80
      %v1145 = vpop.permute.xlu0 %1144
      %vm1147 = vcmp.ge.s32.totalorder %v1070, 80
      %vm1148 = vcmp.lt.s32.totalorder %v1070, 128
      %vm1149 = vmand %vm1147, %vm1148
      %1150 = vst.msk [vmem:[#allocation2 + $0x2] sm:$0x1] %vm1149, %v1145
      %1151 = vst.msk [vmem:[#allocation2 + $0x3] sm:$0x1] %vm1073, %v1069
      %1153 = vst [vmem:[#allocation1] sm:$0xff] %v1069
      %s1154 = scalar_lea.vmem [#allocation1], 1
      %v1155 = vld [vmem:[%s1154] ss:$9 sm:$0xff]
      %1156 = vrot.lane.b32.xlu0 %v1155, 48
      %v1157 = vpop.permute.xlu0 %1156
      %1159 = vst.msk [vmem:[#allocation2 + $0x3] sm:$0x1] %vm1084, %v1157
      %1160 = vst [vmem:[#allocation1] sm:$0xff] %v1069
      %s1161 = scalar_lea.vmem [#allocation1], 2
      %v1162 = vld [vmem:[%s1161] ss:$9 sm:$0xff]
      %1163 = vrot.lane.b32.xlu0 %v1162, 96
      %v1164 = vpop.permute.xlu0 %1163
      %v1165 = vrot.slane %v1164, 7
      %v1166 = vsel %vm872, %v1165, %v1164
      %1168 = vst.msk [vmem:[#allocation2 + $0x3] sm:$0x3] %vm1096, %v1166
      %1169 = vst [vmem:[#allocation1] sm:$0xff] %v1069
      %s1170 = scalar_lea.vmem [#allocation1], 3
      %v1171 = vld [vmem:[%s1170] ss:$9 sm:$0xff]
      %1172 = vrot.lane.b32.xlu0 %v1171, 16
      %v1173 = vpop.permute.xlu0 %1172
      %1175 = vst.msk [vmem:[#allocation2 + $0x4] sm:$0x1] %vm1106, %v1173
      %v1176 = vld [vmem:[#allocation2] sm:$0x1f]
      %v1177 = vld [vmem:[%s6] sm:$0xff]
      %v1178 = vld [vmem:[%s6 + $0x8] sm:$0xff]
      %v1179 = vld [vmem:[%s6 + $0x10] sm:$0xff]
      %v1180 = vld [vmem:[%s6 + $0x18] sm:$0xff]
      %v1181 = vld [vmem:[%s6 + $0x20] sm:$0xff]
      %v1182 = vld [vmem:[%s6 + $0x28] sm:$0xff]
      %v1183 = vld [vmem:[%s6 + $0x30] sm:$0xff]
      %v1184 = vld [vmem:[%s6 + $0x38] sm:$0xff]
      %v1185 = vld [vmem:[%s6 + $0x40] sm:$0xff]
      %v1186 = vld [vmem:[%s6 + $0x48] sm:$0xff]
      %v1187 = vld [vmem:[%s6 + $0x50] sm:$0xff]
      %v1188 = vld [vmem:[%s6 + $0x58] sm:$0xff]
      %v1189 = vld [vmem:[%s6 + $0x60] sm:$0xff]
      %v1190 = vld [vmem:[%s6 + $0x68] sm:$0xff]
      %v1191 = vld [vmem:[%s6 + $0x70] sm:$0xff]
      %v1192 = vld [vmem:[%s6 + $0x78] sm:$0xff]
      %v1193 = vld [vmem:[%s6 + $0x80] sm:$0xff]
      %v1194 = vld [vmem:[%s6 + $0x88] sm:$0xff]
      %v1195 = vld [vmem:[%s6 + $0x90] sm:$0xff]
      %v1196 = vld [vmem:[%s6 + $0x98] sm:$0xff]
      %v1197 = vld [vmem:[%s6 + $0xa0] sm:$0xff]
      %v1198 = vld [vmem:[%s6 + $0xa8] sm:$0xff]
      %v1199 = vld [vmem:[%s6 + $0xb0] sm:$0xff]
      %v1200 = vld [vmem:[%s6 + $0xb8] sm:$0xff]
      %v1201 = vld [vmem:[%s6 + $0xc0] sm:$0xff]
      %v1202 = vld [vmem:[%s6 + $0xc8] sm:$0xff]
      %v1203 = vld [vmem:[%s6 + $0xd0] sm:$0xff]
      %v1204 = vld [vmem:[%s6 + $0xd8] sm:$0xff]
      %v1205 = vld [vmem:[%s6 + $0xe0] sm:$0xff]
      %v1206 = vld [vmem:[%s6 + $0xe8] sm:$0xff]
      %v1207 = vld [vmem:[%s6 + $0xf0] sm:$0xff]
      %v1208 = vld [vmem:[%s6 + $0xf8] sm:$0xff]
      %v1209 = vld [vmem:[%s6 + $0x100] sm:$0xff]
      %v1210 = vld [vmem:[%s6 + $0x108] sm:$0xff]
      %v1211 = vld [vmem:[%s6 + $0x110] sm:$0xff]
      %v1212 = vld [vmem:[%s6 + $0x118] sm:$0xff]
      %v1213 = vld [vmem:[%s6 + $0x120] sm:$0xff]
      %v1214 = vld [vmem:[%s6 + $0x128] sm:$0xff]
      %v1215 = vld [vmem:[%s6 + $0x130] sm:$0xff]
      %v1216 = vld [vmem:[%s6 + $0x138] sm:$0xff]
      %v1217 = vld [vmem:[%s6 + $0x140] sm:$0xff]
      %v1218 = vld [vmem:[%s6 + $0x148] sm:$0xff]
      %v1219 = vld [vmem:[%s6 + $0x150] sm:$0xff]
      %v1220 = vld [vmem:[%s6 + $0x158] sm:$0xff]
      %v1221 = vld [vmem:[%s6 + $0x160] sm:$0xff]
      %v1222 = vld [vmem:[%s6 + $0x168] sm:$0xff]
      %v1223 = vld [vmem:[%s6 + $0x170] sm:$0xff]
      %v1224 = vld [vmem:[%s6 + $0x178] sm:$0xff]
      %v1225 = vld [vmem:[%s6 + $0x180] sm:$0xff]
      %v1226 = vld [vmem:[%s6 + $0x188] sm:$0xff]
      %v1227 = vld [vmem:[%s6 + $0x190] sm:$0xff]
      %v1228 = vld [vmem:[%s6 + $0x198] sm:$0xff]
      %v1229 = vld [vmem:[%s6 + $0x1a0] sm:$0xff]
      %v1230 = vld [vmem:[%s6 + $0x1a8] sm:$0xff]
      %v1231 = vld [vmem:[%s6 + $0x1b0] sm:$0xff]
      %v1232 = vld [vmem:[%s6 + $0x1b8] sm:$0xff]
      %v1233 = vld [vmem:[%s6 + $0x1c0] sm:$0xff]
      %v1234 = vld [vmem:[%s6 + $0x1c8] sm:$0xff]
      %v1235 = vld [vmem:[%s6 + $0x1d0] sm:$0xff]
      %v1236 = vld [vmem:[%s6 + $0x1d8] sm:$0xff]
      %v1237 = vld [vmem:[%s6 + $0x1e0] sm:$0xff]
      %v1238 = vld [vmem:[%s6 + $0x1e8] sm:$0xff]
      %v1239 = vld [vmem:[%s6 + $0x1f0] sm:$0xff]
      %v1240 = vld [vmem:[%s6 + $0x1f8] sm:$0xff]
      %v1241 = vld [vmem:[%s6 + $0x200] sm:$0xff]
      %v1242 = vld [vmem:[%s6 + $0x208] sm:$0xff]
      %v1243 = vld [vmem:[%s6 + $0x210] sm:$0xff]
      %v1244 = vld [vmem:[%s6 + $0x218] sm:$0xff]
      %v1245 = vld [vmem:[%s6 + $0x220] sm:$0xff]
      %v1246 = vld [vmem:[%s6 + $0x228] sm:$0xff]
      %v1247 = vld [vmem:[%s6 + $0x230] sm:$0xff]
      %v1248 = vld [vmem:[%s6 + $0x238] sm:$0xff]
      %v1249 = vld [vmem:[%s7] sm:$0x1]
      %v1251 = vperm.slane %v1176, 0
      %v1252 = vperm.slane %v1176, 1
      %v1253 = vperm.slane %v1176, 2
      %v1254 = vperm.slane %v1176, 3
      %v1255 = vperm.slane %v1176, 4
      %v1260 = vsel %vm613, %v1255, 0
      %1262 = vmatpush.msra.mxu0 %v1192
      %1263 = vmatpush.msra.mxu0 %v1191
      %1264 = vmatpush.msra.mxu0 %v1190
      %1265 = vmatpush.msra.mxu0 %v1189
      %1266 = vmatpush.msra.mxu0 %v1188
      %1267 = vmatpush.msra.mxu0 %v1187
      %1268 = vmatpush.msra.mxu0 %v1186
      %1269 = vmatpush.msra.mxu0 %v1185
      %1270 = vmatpush.msra.mxu0 %v1184
      %1271 = vmatpush.msra.mxu0 %v1183
      %1272 = vmatpush.msra.mxu0 %v1182
      %1273 = vmatpush.msra.mxu0 %v1181
      %1274 = vmatpush.msra.mxu0 %v1180
      %1275 = vmatpush.msra.mxu0 %v1179
      %1276 = vmatpush.msra.mxu0 %v1178
      %1277 = vmatpush.msra.mxu0 %v1177
      %1278 = vmatmul.f32.gmra.mxu0 %v1251
      %v1279 = vpop.f32.mrf.mxu0
      %v1280 = vadd.f32 %v1249, %v1279
      %1281 = vdwg.mxu0
      %1282 = vmatpush.msra.mxu0 %v1208
      %1283 = vmatpush.msra.mxu0 %v1207
      %1284 = vmatpush.msra.mxu0 %v1206
      %1285 = vmatpush.msra.mxu0 %v1205
      %1286 = vmatpush.msra.mxu0 %v1204
      %1287 = vmatpush.msra.mxu0 %v1203
      %1288 = vmatpush.msra.mxu0 %v1202
      %1289 = vmatpush.msra.mxu0 %v1201
      %1290 = vmatpush.msra.mxu0 %v1200
      %1291 = vmatpush.msra.mxu0 %v1199
      %1292 = vmatpush.msra.mxu0 %v1198
      %1293 = vmatpush.msra.mxu0 %v1197
      %1294 = vmatpush.msra.mxu0 %v1196
      %1295 = vmatpush.msra.mxu0 %v1195
      %1296 = vmatpush.msra.mxu0 %v1194
      %1297 = vmatpush.msra.mxu0 %v1193
      %1298 = vmatmul.f32.gmra.mxu0 %v1252
      %v1299 = vpop.f32.mrf.mxu0
      %v1300 = vadd.f32 %v1280, %v1299
      %1301 = vdwg.mxu0
      %1302 = vmatpush.msra.mxu0 %v1224
      %1303 = vmatpush.msra.mxu0 %v1223
      %1304 = vmatpush.msra.mxu0 %v1222
      %1305 = vmatpush.msra.mxu0 %v1221
      %1306 = vmatpush.msra.mxu0 %v1220
      %1307 = vmatpush.msra.mxu0 %v1219
      %1308 = vmatpush.msra.mxu0 %v1218
      %1309 = vmatpush.msra.mxu0 %v1217
      %1310 = vmatpush.msra.mxu0 %v1216
      %1311 = vmatpush.msra.mxu0 %v1215
      %1312 = vmatpush.msra.mxu0 %v1214
      %1313 = vmatpush.msra.mxu0 %v1213
      %1314 = vmatpush.msra.mxu0 %v1212
      %1315 = vmatpush.msra.mxu0 %v1211
      %1316 = vmatpush.msra.mxu0 %v1210
      %1317 = vmatpush.msra.mxu0 %v1209
      %1318 = vmatmul.f32.gmra.mxu0 %v1253
      %v1319 = vpop.f32.mrf.mxu0
      %v1320 = vadd.f32 %v1300, %v1319
      %1321 = vdwg.mxu0
      %1322 = vmatpush.msra.mxu0 %v1240
      %1323 = vmatpush.msra.mxu0 %v1239
      %1324 = vmatpush.msra.mxu0 %v1238
      %1325 = vmatpush.msra.mxu0 %v1237
      %1326 = vmatpush.msra.mxu0 %v1236
      %1327 = vmatpush.msra.mxu0 %v1235
      %1328 = vmatpush.msra.mxu0 %v1234
      %1329 = vmatpush.msra.mxu0 %v1233
      %1330 = vmatpush.msra.mxu0 %v1232
      %1331 = vmatpush.msra.mxu0 %v1231
      %1332 = vmatpush.msra.mxu0 %v1230
      %1333 = vmatpush.msra.mxu0 %v1229
      %1334 = vmatpush.msra.mxu0 %v1228
      %1335 = vmatpush.msra.mxu0 %v1227
      %1336 = vmatpush.msra.mxu0 %v1226
      %1337 = vmatpush.msra.mxu0 %v1225
      %1338 = vmatmul.f32.gmra.mxu0 %v1254
      %v1339 = vpop.f32.mrf.mxu0
      %v1340 = vadd.f32 %v1320, %v1339
      %1341 = vdwg.mxu0
      %1342 = vmatpush.msra.mxu0 0.0
      %1343 = vmatpush.msra.mxu0 0.0
      %1344 = vmatpush.msra.mxu0 0.0
      %1345 = vmatpush.msra.mxu0 0.0
      %1346 = vmatpush.msra.mxu0 0.0
      %1347 = vmatpush.msra.mxu0 0.0
      %1348 = vmatpush.msra.mxu0 0.0
      %1349 = vmatpush.msra.mxu0 0.0
      %1350 = vmatpush.msra.mxu0 %v1248
      %1351 = vmatpush.msra.mxu0 %v1247
      %1352 = vmatpush.msra.mxu0 %v1246
      %1353 = vmatpush.msra.mxu0 %v1245
      %1354 = vmatpush.msra.mxu0 %v1244
      %1355 = vmatpush.msra.mxu0 %v1243
      %1356 = vmatpush.msra.mxu0 %v1242
      %1357 = vmatpush.msra.mxu0 %v1241
      %1358 = vmatmul.f32.gmra.mxu0 %v1260
      %v1359 = vpop.f32.mrf.mxu0
      %v1360 = vadd.f32 %v1340, %v1359
      %1361 = vdwg.mxu0
      %vm1362 = vcmask 516096
      %1363 = vst.msk [vmem:[%s571] sm:$0x1] %vm1362, %v1360
      %v1364 = vld [vmem:[%s563] sm:$0x1]
      %v1365 = vmul.f32 %v1360, 0.5
      %v1366 = vmul.f32 %v1365, 1.442695
      %v1367 = vpow.pop %v1366
      %1369 = vrot.lane.b32.xlu0 %v1367, 96
      %v1370 = vpop.permute.xlu0 %1369
      %v1372 = vmul.f32 %v1364, %v1370
      %v1373 = vadd.f32 %v1360, %v1372
      %v1374 = vld [vmem:[%s8] sm:$0xff]
      %v1375 = vld [vmem:[%s8 + $0x8] sm:$0xff]
      %v1376 = vld [vmem:[%s8 + $0x10] sm:$0xff]
      %v1377 = vld [vmem:[%s8 + $0x18] sm:$0xff]
      %v1378 = vld [vmem:[%s8 + $0x20] sm:$0xff]
      %v1379 = vld [vmem:[%s8 + $0x28] sm:$0xff]
      %v1380 = vld [vmem:[%s8 + $0x30] sm:$0xff]
      %v1381 = vld [vmem:[%s8 + $0x38] sm:$0xff]
      %v1382 = vld [vmem:[%s8 + $0x40] sm:$0xff]
      %v1383 = vld [vmem:[%s8 + $0x48] sm:$0xff]
      %v1384 = vld [vmem:[%s8 + $0x50] sm:$0xff]
      %v1385 = vld [vmem:[%s8 + $0x58] sm:$0xff]
      %vm1386 = vcmask 261120
      %v1388 = vsel %vm1386, %v1373, 0
      %1390 = vmatpush.msra.mxu0 0.0
      %1391 = vmatpush.msra.mxu0 0.0
      %1392 = vmatpush.msra.mxu0 0.0
      %1393 = vmatpush.msra.mxu0 0.0
      %1394 = vmatpush.msra.mxu0 0.0
      %1395 = vmatpush.msra.mxu0 0.0
      %1396 = vmatpush.msra.mxu0 0.0
      %1397 = vmatpush.msra.mxu0 0.0
      %1398 = vmatpush.msra.mxu0 0.0
      %1399 = vmatpush.msra.mxu0 0.0
      %1400 = vmatpush.msra.mxu0 0.0
      %1401 = vmatpush.msra.mxu0 0.0
      %1402 = vmatpush.msra.mxu0 %v1383
      %1403 = vmatpush.msra.mxu0 %v1380
      %1404 = vmatpush.msra.mxu0 %v1377
      %1405 = vmatpush.msra.mxu0 %v1374
      %1406 = vmatmul.f32.gmra.mxu0 %v1388
      %v1407 = vpop.f32.mrf.mxu0
      %v1408 = vadd.f32 0.0, %v1407
      %1409 = vdwg.mxu0
      %1410 = vmatpush.msra.mxu0 0.0
      %1411 = vmatpush.msra.mxu0 0.0
      %1412 = vmatpush.msra.mxu0 0.0
      %1413 = vmatpush.msra.mxu0 0.0
      %1414 = vmatpush.msra.mxu0 0.0
      %1415 = vmatpush.msra.mxu0 0.0
      %1416 = vmatpush.msra.mxu0 0.0
      %1417 = vmatpush.msra.mxu0 0.0
      %1418 = vmatpush.msra.mxu0 0.0
      %1419 = vmatpush.msra.mxu0 0.0
      %1420 = vmatpush.msra.mxu0 0.0
      %1421 = vmatpush.msra.mxu0 0.0
      %1422 = vmatpush.msra.mxu0 %v1384
      %1423 = vmatpush.msra.mxu0 %v1381
      %1424 = vmatpush.msra.mxu0 %v1378
      %1425 = vmatpush.msra.mxu0 %v1375
      %1426 = vmatmul.f32.gmra.mxu0 %v1388
      %v1427 = vpop.f32.mrf.mxu0
      %v1428 = vadd.f32 0.0, %v1427
      %1429 = vdwg.mxu0
      %1430 = vmatpush.msra.mxu0 0.0
      %1431 = vmatpush.msra.mxu0 0.0
      %1432 = vmatpush.msra.mxu0 0.0
      %1433 = vmatpush.msra.mxu0 0.0
      %1434 = vmatpush.msra.mxu0 0.0
      %1435 = vmatpush.msra.mxu0 0.0
      %1436 = vmatpush.msra.mxu0 0.0
      %1437 = vmatpush.msra.mxu0 0.0
      %1438 = vmatpush.msra.mxu0 0.0
      %1439 = vmatpush.msra.mxu0 0.0
      %1440 = vmatpush.msra.mxu0 0.0
      %1441 = vmatpush.msra.mxu0 0.0
      %1442 = vmatpush.msra.mxu0 %v1385
      %1443 = vmatpush.msra.mxu0 %v1382
      %1444 = vmatpush.msra.mxu0 %v1379
      %1445 = vmatpush.msra.mxu0 %v1376
      %1446 = vmatmul.f32.gmra.mxu0 %v1388
      %v1447 = vpop.f32.mrf.mxu0
      %v1448 = vadd.f32 0.0, %v1447
      %1449 = vdwg.mxu0
      %v1450 = vld [vmem:[%s9] sm:$0xff]
      %v1451 = vld [vmem:[%s9 + $0x8] sm:$0xff]
      %v1452 = vld [vmem:[%s9 + $0x10] sm:$0xff]
      %v1453 = vld [vmem:[%s9 + $0x18] sm:$0xf]
      %v1454 = vld [vmem:[%s9 + $0x20] sm:$0xf]
      %v1455 = vld [vmem:[%s9 + $0x28] sm:$0xf]
      %v1456 = vperm.slane %v1408, 0
      %v1457 = vperm.slane %v1428, 0
      %v1458 = vperm.slane %v1448, 0
      %v1459 = vmul.f32 %v1456, %v1450
      %v1460 = vmul.f32 %v1457, %v1451
      %v1461 = vmul.f32 %v1458, %v1452
      %v1462 = vmul.f32 %v1456, %v1453
      %v1463 = vmul.f32 %v1457, %v1454
      %v1464 = vmul.f32 %v1458, %v1455
      %v1465 = vld [vmem:[%s10] sm:$0xff]
      %v1466 = vld [vmem:[%s10 + $0x8] sm:$0xff]
      %v1467 = vld [vmem:[%s10 + $0x10] sm:$0xff]
      %v1468 = vld [vmem:[%s10 + $0x18] sm:$0xff]
      %v1469 = vld [vmem:[%s10 + $0x20] sm:$0xff]
      %v1470 = vld [vmem:[%s10 + $0x28] sm:$0xff]
      %v1471 = vld [vmem:[%s10 + $0x30] sm:$0xff]
      %v1472 = vld [vmem:[%s10 + $0x38] sm:$0xff]
      %v1473 = vld [vmem:[%s10 + $0x40] sm:$0xff]
      %v1474 = vld [vmem:[%s10 + $0x48] sm:$0xff]
      %v1475 = vld [vmem:[%s10 + $0x50] sm:$0xff]
      %v1476 = vld [vmem:[%s10 + $0x58] sm:$0xff]
      %v1477 = vld [vmem:[%s10 + $0x60] sm:$0xff]
      %v1478 = vld [vmem:[%s10 + $0x68] sm:$0xff]
      %v1479 = vld [vmem:[%s10 + $0x70] sm:$0xff]
      %v1480 = vld [vmem:[%s10 + $0x78] sm:$0xff]
      %v1481 = vld [vmem:[%s10 + $0x80] sm:$0xff]
      %v1482 = vld [vmem:[%s10 + $0x88] sm:$0xff]
      %v1483 = vld [vmem:[%s10 + $0x90] sm:$0xff]
      %v1484 = vld [vmem:[%s10 + $0x98] sm:$0xff]
      %v1485 = vld [vmem:[%s10 + $0xa0] sm:$0xff]
      %v1486 = vld [vmem:[%s10 + $0xa8] sm:$0xff]
      %v1487 = vld [vmem:[%s10 + $0xb0] sm:$0xff]
      %v1488 = vld [vmem:[%s10 + $0xb8] sm:$0xff]
      %v1489 = vld [vmem:[%s10 + $0xc0] sm:$0xff]
      %v1490 = vld [vmem:[%s10 + $0xc8] sm:$0xff]
      %v1491 = vld [vmem:[%s10 + $0xd0] sm:$0xff]
      %v1492 = vld [vmem:[%s10 + $0xd8] sm:$0xff]
      %v1493 = vld [vmem:[%s10 + $0xe0] sm:$0xff]
      %v1494 = vld [vmem:[%s10 + $0xe8] sm:$0xff]
      %v1495 = vld [vmem:[%s10 + $0xf0] sm:$0xff]
      %v1496 = vld [vmem:[%s10 + $0xf8] sm:$0xff]
      %v1497 = vld [vmem:[%s10 + $0x100] sm:$0xff]
      %v1498 = vld [vmem:[%s10 + $0x108] sm:$0xff]
      %v1499 = vld [vmem:[%s10 + $0x110] sm:$0xff]
      %v1500 = vld [vmem:[%s10 + $0x118] sm:$0xff]
      %v1501 = vld [vmem:[%s10 + $0x120] sm:$0xff]
      %v1502 = vld [vmem:[%s10 + $0x128] sm:$0xff]
      %v1503 = vld [vmem:[%s10 + $0x130] sm:$0xff]
      %v1504 = vld [vmem:[%s10 + $0x138] sm:$0xff]
      %v1505 = vld [vmem:[%s10 + $0x140] sm:$0xff]
      %v1506 = vld [vmem:[%s10 + $0x148] sm:$0xff]
      %v1507 = vld [vmem:[%s10 + $0x150] sm:$0xff]
      %v1508 = vld [vmem:[%s10 + $0x158] sm:$0xff]
      %v1509 = vld [vmem:[%s10 + $0x160] sm:$0xff]
      %v1510 = vld [vmem:[%s10 + $0x168] sm:$0xff]
      %v1511 = vld [vmem:[%s10 + $0x170] sm:$0xff]
      %v1512 = vld [vmem:[%s10 + $0x178] sm:$0xff]
      %v1513 = vld [vmem:[%s11] sm:$0xff]
      %v1514 = vld [vmem:[%s11 + $0x8] sm:$0xf]
      %1515 = vmatpush.msra.mxu0 %v1480
      %1516 = vmatpush.msra.mxu0 %v1479
      %1517 = vmatpush.msra.mxu0 %v1478
      %1518 = vmatpush.msra.mxu0 %v1477
      %1519 = vmatpush.msra.mxu0 %v1476
      %1520 = vmatpush.msra.mxu0 %v1475
      %1521 = vmatpush.msra.mxu0 %v1474
      %1522 = vmatpush.msra.mxu0 %v1473
      %1523 = vmatpush.msra.mxu0 %v1472
      %1524 = vmatpush.msra.mxu0 %v1471
      %1525 = vmatpush.msra.mxu0 %v1470
      %1526 = vmatpush.msra.mxu0 %v1469
      %1527 = vmatpush.msra.mxu0 %v1468
      %1528 = vmatpush.msra.mxu0 %v1467
      %1529 = vmatpush.msra.mxu0 %v1466
      %1530 = vmatpush.msra.mxu0 %v1465
      %1531 = vmatmul.f32.gmra.mxu0 %v1459
      %v1532 = vpop.f32.mrf.mxu0
      %v1533 = vadd.f32 %v1513, %v1532
      %1534 = vmatmul.f32.gmra.mxu0 %v1462
      %v1535 = vpop.f32.mrf.mxu0
      %v1536 = vadd.f32 %v1514, %v1535
      %1537 = vdwg.mxu0
      %1538 = vmatpush.msra.mxu0 %v1496
      %1539 = vmatpush.msra.mxu0 %v1495
      %1540 = vmatpush.msra.mxu0 %v1494
      %1541 = vmatpush.msra.mxu0 %v1493
      %1542 = vmatpush.msra.mxu0 %v1492
      %1543 = vmatpush.msra.mxu0 %v1491
      %1544 = vmatpush.msra.mxu0 %v1490
      %1545 = vmatpush.msra.mxu0 %v1489
      %1546 = vmatpush.msra.mxu0 %v1488
      %1547 = vmatpush.msra.mxu0 %v1487
      %1548 = vmatpush.msra.mxu0 %v1486
      %1549 = vmatpush.msra.mxu0 %v1485
      %1550 = vmatpush.msra.mxu0 %v1484
      %1551 = vmatpush.msra.mxu0 %v1483
      %1552 = vmatpush.msra.mxu0 %v1482
      %1553 = vmatpush.msra.mxu0 %v1481
      %1554 = vmatmul.f32.gmra.mxu0 %v1460
      %v1555 = vpop.f32.mrf.mxu0
      %v1556 = vadd.f32 %v1533, %v1555
      %1557 = vmatmul.f32.gmra.mxu0 %v1463
      %v1558 = vpop.f32.mrf.mxu0
      %v1559 = vadd.f32 %v1536, %v1558
      %1560 = vdwg.mxu0
      %1561 = vmatpush.msra.mxu0 %v1512
      %1562 = vmatpush.msra.mxu0 %v1511
      %1563 = vmatpush.msra.mxu0 %v1510
      %1564 = vmatpush.msra.mxu0 %v1509
      %1565 = vmatpush.msra.mxu0 %v1508
      %1566 = vmatpush.msra.mxu0 %v1507
      %1567 = vmatpush.msra.mxu0 %v1506
      %1568 = vmatpush.msra.mxu0 %v1505
      %1569 = vmatpush.msra.mxu0 %v1504
      %1570 = vmatpush.msra.mxu0 %v1503
      %1571 = vmatpush.msra.mxu0 %v1502
      %1572 = vmatpush.msra.mxu0 %v1501
      %1573 = vmatpush.msra.mxu0 %v1500
      %1574 = vmatpush.msra.mxu0 %v1499
      %1575 = vmatpush.msra.mxu0 %v1498
      %1576 = vmatpush.msra.mxu0 %v1497
      %1577 = vmatmul.f32.gmra.mxu0 %v1461
      %v1578 = vpop.f32.mrf.mxu0
      %v1579 = vadd.f32 %v1556, %v1578
      %1580 = vmatmul.f32.gmra.mxu0 %v1464
      %v1581 = vpop.f32.mrf.mxu0
      %v1582 = vadd.f32 %v1559, %v1581
      %1583 = vdwg.mxu0
      %vm1584 = vcmask 386048
      %1585 = vst.msk [vmem:[#allocation3] sm:$0x3] %vm1584, 0.0
      %1586 = vst.msk [vmem:[#allocation3 + $0xe] sm:$0x3] %vm1584, 0.0
      %vm1587 = vcmask 392192
      %1588 = vst.msk [vmem:[#allocation3 + $0x2] sm:$0xff] %vm1587, %v1579
      %vm1589 = vcmask 388096
      %1590 = vst.msk [vmem:[#allocation3 + $0xa] sm:$0xf] %vm1589, %v1582
      %v1591 = vld [vmem:[#allocation3] sm:$0xff]
      %v1592 = vld [vmem:[#allocation3 + $0x8] sm:$0xff]
      %v1593 = vld [vmem:[%s12] sm:$0xff]
      %v1594 = vld [vmem:[%s12 + $0x8] sm:$0xff]
      %v1595 = vld [vmem:[%s12 + $0x10] sm:$0xff]
      %v1596 = vld [vmem:[%s12 + $0x18] sm:$0xff]
      %v1597 = vld [vmem:[%s12 + $0x20] sm:$0xff]
      %v1598 = vld [vmem:[%s12 + $0x28] sm:$0xff]
      %v1599 = vld [vmem:[%s12 + $0x30] sm:$0xff]
      %v1600 = vld [vmem:[%s12 + $0x38] sm:$0xff]
      %v1601 = vld [vmem:[%s12 + $0x40] sm:$0xff]
      %v1602 = vld [vmem:[%s12 + $0x48] sm:$0xff]
      %v1603 = vld [vmem:[%s12 + $0x50] sm:$0xff]
      %v1604 = vld [vmem:[%s12 + $0x58] sm:$0xff]
      %s1605 = scalar_lea.vmem %s12, 96
      %v1606 = vld [vmem:[%s1605] sm:$0xff]
      %v1607 = vld [vmem:[%s1605 + $0x8] sm:$0xff]
      %v1608 = vld [vmem:[%s1605 + $0x10] sm:$0xff]
      %v1609 = vld [vmem:[%s1605 + $0x18] sm:$0xff]
      %v1610 = vld [vmem:[%s1605 + $0x20] sm:$0xff]
      %v1611 = vld [vmem:[%s1605 + $0x28] sm:$0xff]
      %v1612 = vld [vmem:[%s1605 + $0x30] sm:$0xff]
      %v1613 = vld [vmem:[%s1605 + $0x38] sm:$0xff]
      %v1614 = vld [vmem:[%s1605 + $0x40] sm:$0xff]
      %v1615 = vld [vmem:[%s1605 + $0x48] sm:$0xff]
      %v1616 = vld [vmem:[%s1605 + $0x50] sm:$0xff]
      %v1617 = vld [vmem:[%s1605 + $0x58] sm:$0xff]
      %v1620 = vrot.slane %v1591, 1
      %v1621 = vrot.slane %v1592, 1
      %v1622 = vsel %vm609, %v1620, %v1621
      %v1623 = vsel %vm1587, %v1622, 0
      %v1625 = vsel %vm1587, %v1621, 0
      %1627 = vmatpush.msra.mxu0 0.0
      %1628 = vmatpush.msra.mxu0 0.0
      %1629 = vmatpush.msra.mxu0 0.0
      %1630 = vmatpush.msra.mxu0 0.0
      %1631 = vmatpush.msra.mxu0 0.0
      %1632 = vmatpush.msra.mxu0 0.0
      %1633 = vmatpush.msra.mxu0 0.0
      %1634 = vmatpush.msra.mxu0 0.0
      %1635 = vmatpush.msra.mxu0 0.0
      %1636 = vmatpush.msra.mxu0 0.0
      %1637 = vmatpush.msra.mxu0 %v1616
      %1638 = vmatpush.msra.mxu0 %v1614
      %1639 = vmatpush.msra.mxu0 %v1612
      %1640 = vmatpush.msra.mxu0 %v1610
      %1641 = vmatpush.msra.mxu0 %v1608
      %1642 = vmatpush.msra.mxu0 %v1606
      %1643 = vmatmul.f32.gmra.mxu0 %v1623
      %v1644 = vpop.f32.mrf.mxu0
      %v1645 = vadd.f32 0.0, %v1644
      %1646 = vmatmul.f32.gmra.mxu0 %v1625
      %v1647 = vpop.f32.mrf.mxu0
      %v1648 = vadd.f32 0.0, %v1647
      %1649 = vdwg.mxu0
      %1650 = vmatpush.msra.mxu0 0.0
      %1651 = vmatpush.msra.mxu0 0.0
      %1652 = vmatpush.msra.mxu0 0.0
      %1653 = vmatpush.msra.mxu0 0.0
      %1654 = vmatpush.msra.mxu0 0.0
      %1655 = vmatpush.msra.mxu0 0.0
      %1656 = vmatpush.msra.mxu0 0.0
      %1657 = vmatpush.msra.mxu0 0.0
      %1658 = vmatpush.msra.mxu0 0.0
      %1659 = vmatpush.msra.mxu0 0.0
      %1660 = vmatpush.msra.mxu0 %v1617
      %1661 = vmatpush.msra.mxu0 %v1615
      %1662 = vmatpush.msra.mxu0 %v1613
      %1663 = vmatpush.msra.mxu0 %v1611
      %1664 = vmatpush.msra.mxu0 %v1609
      %1665 = vmatpush.msra.mxu0 %v1607
      %1666 = vmatmul.f32.gmra.mxu0 %v1623
      %v1667 = vpop.f32.mrf.mxu0
      %v1668 = vadd.f32 0.0, %v1667
      %1669 = vmatmul.f32.gmra.mxu0 %v1625
      %v1670 = vpop.f32.mrf.mxu0
      %v1671 = vadd.f32 0.0, %v1670
      %1672 = vdwg.mxu0
      %v1673 = vsel %vm1587, %v1591, 0
      %v1675 = vsel %vm1587, %v1592, 0
      %1677 = vmatpush.msra.mxu0 0.0
      %1678 = vmatpush.msra.mxu0 0.0
      %1679 = vmatpush.msra.mxu0 0.0
      %1680 = vmatpush.msra.mxu0 0.0
      %1681 = vmatpush.msra.mxu0 0.0
      %1682 = vmatpush.msra.mxu0 0.0
      %1683 = vmatpush.msra.mxu0 0.0
      %1684 = vmatpush.msra.mxu0 0.0
      %1685 = vmatpush.msra.mxu0 0.0
      %1686 = vmatpush.msra.mxu0 0.0
      %1687 = vmatpush.msra.mxu0 %v1603
      %1688 = vmatpush.msra.mxu0 %v1601
      %1689 = vmatpush.msra.mxu0 %v1599
      %1690 = vmatpush.msra.mxu0 %v1597
      %1691 = vmatpush.msra.mxu0 %v1595
      %1692 = vmatpush.msra.mxu0 %v1593
      %1693 = vmatmul.f32.gmra.mxu0 %v1673
      %v1694 = vpop.f32.mrf.mxu0
      %v1695 = vadd.f32 %v1645, %v1694
      %1696 = vmatmul.f32.gmra.mxu0 %v1675
      %v1697 = vpop.f32.mrf.mxu0
      %v1698 = vadd.f32 %v1648, %v1697
      %1699 = vdwg.mxu0
      %1700 = vmatpush.msra.mxu0 0.0
      %1701 = vmatpush.msra.mxu0 0.0
      %1702 = vmatpush.msra.mxu0 0.0
      %1703 = vmatpush.msra.mxu0 0.0
      %1704 = vmatpush.msra.mxu0 0.0
      %1705 = vmatpush.msra.mxu0 0.0
      %1706 = vmatpush.msra.mxu0 0.0
      %1707 = vmatpush.msra.mxu0 0.0
      %1708 = vmatpush.msra.mxu0 0.0
      %1709 = vmatpush.msra.mxu0 0.0
      %1710 = vmatpush.msra.mxu0 %v1604
      %1711 = vmatpush.msra.mxu0 %v1602
      %1712 = vmatpush.msra.mxu0 %v1600
      %1713 = vmatpush.msra.mxu0 %v1598
      %1714 = vmatpush.msra.mxu0 %v1596
      %1715 = vmatpush.msra.mxu0 %v1594
      %1716 = vmatmul.f32.gmra.mxu0 %v1673
      %v1717 = vpop.f32.mrf.mxu0
      %v1718 = vadd.f32 %v1668, %v1717
      %1719 = vmatmul.f32.gmra.mxu0 %v1675
      %v1720 = vpop.f32.mrf.mxu0
      %v1721 = vadd.f32 %v1671, %v1720
      %1722 = vdwg.mxu0
      %s1723 = scalar_lea.vmem %s12, 192
      %v1724 = vld [vmem:[%s1723] sm:$0xff]
      %v1725 = vld [vmem:[%s1723 + $0x8] sm:$0xff]
      %v1726 = vld [vmem:[%s1723 + $0x10] sm:$0xff]
      %v1727 = vld [vmem:[%s1723 + $0x18] sm:$0xff]
      %v1728 = vld [vmem:[%s1723 + $0x20] sm:$0xff]
      %v1729 = vld [vmem:[%s1723 + $0x28] sm:$0xff]
      %v1730 = vld [vmem:[%s1723 + $0x30] sm:$0xff]
      %v1731 = vld [vmem:[%s1723 + $0x38] sm:$0xff]
      %v1732 = vld [vmem:[%s1723 + $0x40] sm:$0xff]
      %v1733 = vld [vmem:[%s1723 + $0x48] sm:$0xff]
      %v1734 = vld [vmem:[%s1723 + $0x50] sm:$0xff]
      %v1735 = vld [vmem:[%s1723 + $0x58] sm:$0xff]
      %v1736 = vrot.slane %v1591, 2
      %v1737 = vrot.slane %v1592, 2
      %v1738 = vsel %vm731, %v1736, %v1737
      %v1739 = vsel %vm1587, %v1738, 0
      %v1741 = vsel %vm1587, %v1737, 0
      %1743 = vmatpush.msra.mxu0 0.0
      %1744 = vmatpush.msra.mxu0 0.0
      %1745 = vmatpush.msra.mxu0 0.0
      %1746 = vmatpush.msra.mxu0 0.0
      %1747 = vmatpush.msra.mxu0 0.0
      %1748 = vmatpush.msra.mxu0 0.0
      %1749 = vmatpush.msra.mxu0 0.0
      %1750 = vmatpush.msra.mxu0 0.0
      %1751 = vmatpush.msra.mxu0 0.0
      %1752 = vmatpush.msra.mxu0 0.0
      %1753 = vmatpush.msra.mxu0 %v1734
      %1754 = vmatpush.msra.mxu0 %v1732
      %1755 = vmatpush.msra.mxu0 %v1730
      %1756 = vmatpush.msra.mxu0 %v1728
      %1757 = vmatpush.msra.mxu0 %v1726
      %1758 = vmatpush.msra.mxu0 %v1724
      %1759 = vmatmul.f32.gmra.mxu0 %v1739
      %v1760 = vpop.f32.mrf.mxu0
      %v1761 = vadd.f32 0.0, %v1760
      %1762 = vmatmul.f32.gmra.mxu0 %v1741
      %v1763 = vpop.f32.mrf.mxu0
      %v1764 = vadd.f32 0.0, %v1763
      %1765 = vdwg.mxu0
      %1766 = vmatpush.msra.mxu0 0.0
      %1767 = vmatpush.msra.mxu0 0.0
      %1768 = vmatpush.msra.mxu0 0.0
      %1769 = vmatpush.msra.mxu0 0.0
      %1770 = vmatpush.msra.mxu0 0.0
      %1771 = vmatpush.msra.mxu0 0.0
      %1772 = vmatpush.msra.mxu0 0.0
      %1773 = vmatpush.msra.mxu0 0.0
      %1774 = vmatpush.msra.mxu0 0.0
      %1775 = vmatpush.msra.mxu0 0.0
      %1776 = vmatpush.msra.mxu0 %v1735
      %1777 = vmatpush.msra.mxu0 %v1733
      %1778 = vmatpush.msra.mxu0 %v1731
      %1779 = vmatpush.msra.mxu0 %v1729
      %1780 = vmatpush.msra.mxu0 %v1727
      %1781 = vmatpush.msra.mxu0 %v1725
      %1782 = vmatmul.f32.gmra.mxu0 %v1739
      %v1783 = vpop.f32.mrf.mxu0
      %v1784 = vadd.f32 0.0, %v1783
      %1785 = vmatmul.f32.gmra.mxu0 %v1741
      %v1786 = vpop.f32.mrf.mxu0
      %v1787 = vadd.f32 0.0, %v1786
      %1788 = vdwg.mxu0
      %v1789 = vadd.f32 %v1695, %v1761
      %v1790 = vadd.f32 %v1718, %v1784
      %v1791 = vadd.f32 %v1698, %v1764
      %v1792 = vadd.f32 %v1721, %v1787
      %v1793 = vld [vmem:[%s13] sm:$0x3]
      %v1795 = vperm.slane %v1793, 0
      %v1796 = vperm.slane %v1793, 1
      %v1799 = vadd.f32 %v1789, %v1795
      %v1800 = vadd.f32 %v1790, %v1796
      %v1801 = vadd.f32 %v1791, %v1795
      %v1802 = vadd.f32 %v1792, %v1796
      %v1803 = vmax.f32 %v1799, 0.0
      %v1804 = vmax.f32 %v1800, 0.0
      %v1805 = vmax.f32 %v1801, 0.0
      %v1806 = vmax.f32 %v1802, 0.0
      %1807 = vst [vmem:[#allocation4] sm:$0x3] 0.0
      %vm1808 = vcmask 779264
      %1809 = vst.msk [vmem:[#allocation4 + $0x8] sm:$0x3] %vm1808, 0.0
      %1810 = vst [vmem:[#allocation4 + $0x20] sm:$0x3] 0.0
      %1811 = vst.msk [vmem:[#allocation4 + $0x28] sm:$0x3] %vm1808, 0.0
      %vm1816 = vcmask 1041408
      %v1817 = vrot.slane %v1803, 6
      %v1818 = vrot.slane %v1804, 6
      %v1819 = vrot.slane %v1805, 6
      %v1820 = vsel %vm1816, %v1817, %v1819
      %v1821 = vrot.slane %v1806, 6
      %v1822 = vsel %vm1816, %v1818, %v1821
      %1827 = vst [vmem:[#allocation4] sm:$0xfc] %v1817
      %vm1828 = vcmask 785410
      %1829 = vst.msk [vmem:[#allocation4 + $0x8] sm:$0xfc] %vm1828, %v1818
      %1830 = vst [vmem:[#allocation4 + $0x10] sm:$0xff] %v1820
      %1831 = vst.msk [vmem:[#allocation4 + $0x18] sm:$0xff] %vm872, %v1822
      %v1832 = vld [vmem:[#allocation4] sm:$0xff]
      %v1833 = vld [vmem:[#allocation4 + $0x8] sm:$0xff]
      %v1834 = vld [vmem:[#allocation4 + $0x10] sm:$0xff]
      %v1835 = vld [vmem:[#allocation4 + $0x18] sm:$0xff]
      %v1836 = vld [vmem:[#allocation4 + $0x20] sm:$0x3]
      %v1837 = vld [vmem:[#allocation4 + $0x28] sm:$0x3]
      %v1838 = vld [vmem:[%s14] sm:$0xff]
      %v1839 = vld [vmem:[%s14 + $0x8] sm:$0xff]
      %v1840 = vld [vmem:[%s14 + $0x10] sm:$0xff]
      %v1841 = vld [vmem:[%s14 + $0x18] sm:$0xff]
      %v1842 = vld [vmem:[%s14 + $0x20] sm:$0xff]
      %v1843 = vld [vmem:[%s14 + $0x28] sm:$0xff]
      %v1844 = vld [vmem:[%s14 + $0x30] sm:$0xff]
      %v1845 = vld [vmem:[%s14 + $0x38] sm:$0xff]
      %v1846 = vld [vmem:[%s14 + $0x40] sm:$0xff]
      %v1847 = vld [vmem:[%s14 + $0x48] sm:$0xff]
      %v1848 = vld [vmem:[%s14 + $0x50] sm:$0xff]
      %v1849 = vld [vmem:[%s14 + $0x58] sm:$0xff]
      %v1850 = vld [vmem:[%s14 + $0x60] sm:$0xff]
      %v1851 = vld [vmem:[%s14 + $0x68] sm:$0xff]
      %v1852 = vld [vmem:[%s14 + $0x70] sm:$0xff]
      %v1853 = vld [vmem:[%s14 + $0x78] sm:$0xff]
      %v1854 = vld [vmem:[%s14 + $0x80] sm:$0xff]
      %v1855 = vld [vmem:[%s14 + $0x88] sm:$0xff]
      %v1856 = vld [vmem:[%s14 + $0x90] sm:$0xff]
      %v1857 = vld [vmem:[%s14 + $0x98] sm:$0xff]
      %v1858 = vld [vmem:[%s14 + $0xa0] sm:$0xff]
      %v1859 = vld [vmem:[%s14 + $0xa8] sm:$0xff]
      %v1860 = vld [vmem:[%s14 + $0xb0] sm:$0xff]
      %v1861 = vld [vmem:[%s14 + $0xb8] sm:$0xff]
      %v1862 = vld [vmem:[%s14 + $0xc0] sm:$0xff]
      %v1863 = vld [vmem:[%s14 + $0xc8] sm:$0xff]
      %v1864 = vld [vmem:[%s14 + $0xd0] sm:$0xff]
      %v1865 = vld [vmem:[%s14 + $0xd8] sm:$0xff]
      %s1866 = scalar_lea.vmem %s14, 224
      %v1867 = vld [vmem:[%s1866] sm:$0xff]
      %v1868 = vld [vmem:[%s1866 + $0x8] sm:$0xff]
      %v1869 = vld [vmem:[%s1866 + $0x10] sm:$0xff]
      %v1870 = vld [vmem:[%s1866 + $0x18] sm:$0xff]
      %v1871 = vld [vmem:[%s1866 + $0x20] sm:$0xff]
      %v1872 = vld [vmem:[%s1866 + $0x28] sm:$0xff]
      %v1873 = vld [vmem:[%s1866 + $0x30] sm:$0xff]
      %v1874 = vld [vmem:[%s1866 + $0x38] sm:$0xff]
      %v1875 = vld [vmem:[%s1866 + $0x40] sm:$0xff]
      %v1876 = vld [vmem:[%s1866 + $0x48] sm:$0xff]
      %v1877 = vld [vmem:[%s1866 + $0x50] sm:$0xff]
      %v1878 = vld [vmem:[%s1866 + $0x58] sm:$0xff]
      %v1879 = vld [vmem:[%s1866 + $0x60] sm:$0xff]
      %v1880 = vld [vmem:[%s1866 + $0x68] sm:$0xff]
      %v1881 = vld [vmem:[%s1866 + $0x70] sm:$0xff]
      %v1882 = vld [vmem:[%s1866 + $0x78] sm:$0xff]
      %v1883 = vld [vmem:[%s1866 + $0x80] sm:$0xff]
      %v1884 = vld [vmem:[%s1866 + $0x88] sm:$0xff]
      %v1885 = vld [vmem:[%s1866 + $0x90] sm:$0xff]
      %v1886 = vld [vmem:[%s1866 + $0x98] sm:$0xff]
      %v1887 = vld [vmem:[%s1866 + $0xa0] sm:$0xff]
      %v1888 = vld [vmem:[%s1866 + $0xa8] sm:$0xff]
      %v1889 = vld [vmem:[%s1866 + $0xb0] sm:$0xff]
      %v1890 = vld [vmem:[%s1866 + $0xb8] sm:$0xff]
      %v1891 = vld [vmem:[%s1866 + $0xc0] sm:$0xff]
      %v1892 = vld [vmem:[%s1866 + $0xc8] sm:$0xff]
      %v1893 = vld [vmem:[%s1866 + $0xd0] sm:$0xff]
      %v1894 = vld [vmem:[%s1866 + $0xd8] sm:$0xff]
      %v1901 = vrot.slane %v1832, 1
      %v1902 = vrot.slane %v1834, 1
      %v1903 = vsel %vm609, %v1901, %v1902
      %v1904 = vrot.slane %v1833, 1
      %v1905 = vrot.slane %v1835, 1
      %v1906 = vsel %vm609, %v1904, %v1905
      %v1907 = vrot.slane %v1836, 1
      %v1908 = vsel %vm609, %v1902, %v1907
      %v1909 = vrot.slane %v1837, 1
      %v1910 = vsel %vm609, %v1905, %v1909
      %v1913 = vsel %vm872, %v1906, 0
      %v1915 = vsel %vm872, %v1910, 0
      %1917 = vmatpush.msra.mxu0 %v1882
      %1918 = vmatpush.msra.mxu0 %v1881
      %1919 = vmatpush.msra.mxu0 %v1880
      %1920 = vmatpush.msra.mxu0 %v1879
      %1921 = vmatpush.msra.mxu0 %v1878
      %1922 = vmatpush.msra.mxu0 %v1877
      %1923 = vmatpush.msra.mxu0 %v1876
      %1924 = vmatpush.msra.mxu0 %v1875
      %1925 = vmatpush.msra.mxu0 %v1874
      %1926 = vmatpush.msra.mxu0 %v1873
      %1927 = vmatpush.msra.mxu0 %v1872
      %1928 = vmatpush.msra.mxu0 %v1871
      %1929 = vmatpush.msra.mxu0 %v1870
      %1930 = vmatpush.msra.mxu0 %v1869
      %1931 = vmatpush.msra.mxu0 %v1868
      %1932 = vmatpush.msra.mxu0 %v1867
      %1933 = vmatmul.f32.gmra.mxu0 %v1903
      %v1934 = vpop.f32.mrf.mxu0
      %v1935 = vadd.f32 0.0, %v1934
      %1936 = vmatmul.f32.gmra.mxu0 %v1908
      %v1937 = vpop.f32.mrf.mxu0
      %v1938 = vadd.f32 0.0, %v1937
      %1939 = vdwg.mxu0
      %1940 = vmatpush.msra.mxu0 0.0
      %1941 = vmatpush.msra.mxu0 0.0
      %1942 = vmatpush.msra.mxu0 0.0
      %1943 = vmatpush.msra.mxu0 0.0
      %1944 = vmatpush.msra.mxu0 %v1894
      %1945 = vmatpush.msra.mxu0 %v1893
      %1946 = vmatpush.msra.mxu0 %v1892
      %1947 = vmatpush.msra.mxu0 %v1891
      %1948 = vmatpush.msra.mxu0 %v1890
      %1949 = vmatpush.msra.mxu0 %v1889
      %1950 = vmatpush.msra.mxu0 %v1888
      %1951 = vmatpush.msra.mxu0 %v1887
      %1952 = vmatpush.msra.mxu0 %v1886
      %1953 = vmatpush.msra.mxu0 %v1885
      %1954 = vmatpush.msra.mxu0 %v1884
      %1955 = vmatpush.msra.mxu0 %v1883
      %1956 = vmatmul.f32.gmra.mxu0 %v1913
      %v1957 = vpop.f32.mrf.mxu0
      %v1958 = vadd.f32 %v1935, %v1957
      %1959 = vmatmul.f32.gmra.mxu0 %v1915
      %v1960 = vpop.f32.mrf.mxu0
      %v1961 = vadd.f32 %v1938, %v1960
      %1962 = vdwg.mxu0
      %v1963 = vsel %vm872, %v1833, 0
      %v1965 = vsel %vm872, %v1835, 0
      %1967 = vmatpush.msra.mxu0 %v1853
      %1968 = vmatpush.msra.mxu0 %v1852
      %1969 = vmatpush.msra.mxu0 %v1851
      %1970 = vmatpush.msra.mxu0 %v1850
      %1971 = vmatpush.msra.mxu0 %v1849
      %1972 = vmatpush.msra.mxu0 %v1848
      %1973 = vmatpush.msra.mxu0 %v1847
      %1974 = vmatpush.msra.mxu0 %v1846
      %1975 = vmatpush.msra.mxu0 %v1845
      %1976 = vmatpush.msra.mxu0 %v1844
      %1977 = vmatpush.msra.mxu0 %v1843
      %1978 = vmatpush.msra.mxu0 %v1842
      %1979 = vmatpush.msra.mxu0 %v1841
      %1980 = vmatpush.msra.mxu0 %v1840
      %1981 = vmatpush.msra.mxu0 %v1839
      %1982 = vmatpush.msra.mxu0 %v1838
      %1983 = vmatmul.f32.gmra.mxu0 %v1832
      %v1984 = vpop.f32.mrf.mxu0
      %v1985 = vadd.f32 %v1958, %v1984
      %1986 = vmatmul.f32.gmra.mxu0 %v1834
      %v1987 = vpop.f32.mrf.mxu0
      %v1988 = vadd.f32 %v1961, %v1987
      %1989 = vdwg.mxu0
      %1990 = vmatpush.msra.mxu0 0.0
      %1991 = vmatpush.msra.mxu0 0.0
      %1992 = vmatpush.msra.mxu0 0.0
      %1993 = vmatpush.msra.mxu0 0.0
      %1994 = vmatpush.msra.mxu0 %v1865
      %1995 = vmatpush.msra.mxu0 %v1864
      %1996 = vmatpush.msra.mxu0 %v1863
      %1997 = vmatpush.msra.mxu0 %v1862
      %1998 = vmatpush.msra.mxu0 %v1861
      %1999 = vmatpush.msra.mxu0 %v1860
      %2000 = vmatpush.msra.mxu0 %v1859
      %2001 = vmatpush.msra.mxu0 %v1858
      %2002 = vmatpush.msra.mxu0 %v1857
      %2003 = vmatpush.msra.mxu0 %v1856
      %2004 = vmatpush.msra.mxu0 %v1855
      %2005 = vmatpush.msra.mxu0 %v1854
      %2006 = vmatmul.f32.gmra.mxu0 %v1963
      %v2007 = vpop.f32.mrf.mxu0
      %v2008 = vadd.f32 %v1985, %v2007
      %2009 = vmatmul.f32.gmra.mxu0 %v1965
      %v2010 = vpop.f32.mrf.mxu0
      %v2011 = vadd.f32 %v1988, %v2010
      %2012 = vdwg.mxu0
      %s2013 = scalar_lea.vmem %s14, 448
      %v2014 = vld [vmem:[%s2013] sm:$0xff]
      %v2015 = vld [vmem:[%s2013 + $0x8] sm:$0xff]
      %v2016 = vld [vmem:[%s2013 + $0x10] sm:$0xff]
      %v2017 = vld [vmem:[%s2013 + $0x18] sm:$0xff]
      %v2018 = vld [vmem:[%s2013 + $0x20] sm:$0xff]
      %v2019 = vld [vmem:[%s2013 + $0x28] sm:$0xff]
      %v2020 = vld [vmem:[%s2013 + $0x30] sm:$0xff]
      %v2021 = vld [vmem:[%s2013 + $0x38] sm:$0xff]
      %v2022 = vld [vmem:[%s2013 + $0x40] sm:$0xff]
      %v2023 = vld [vmem:[%s2013 + $0x48] sm:$0xff]
      %v2024 = vld [vmem:[%s2013 + $0x50] sm:$0xff]
      %v2025 = vld [vmem:[%s2013 + $0x58] sm:$0xff]
      %v2026 = vld [vmem:[%s2013 + $0x60] sm:$0xff]
      %v2027 = vld [vmem:[%s2013 + $0x68] sm:$0xff]
      %v2028 = vld [vmem:[%s2013 + $0x70] sm:$0xff]
      %v2029 = vld [vmem:[%s2013 + $0x78] sm:$0xff]
      %v2030 = vld [vmem:[%s2013 + $0x80] sm:$0xff]
      %v2031 = vld [vmem:[%s2013 + $0x88] sm:$0xff]
      %v2032 = vld [vmem:[%s2013 + $0x90] sm:$0xff]
      %v2033 = vld [vmem:[%s2013 + $0x98] sm:$0xff]
      %v2034 = vld [vmem:[%s2013 + $0xa0] sm:$0xff]
      %v2035 = vld [vmem:[%s2013 + $0xa8] sm:$0xff]
      %v2036 = vld [vmem:[%s2013 + $0xb0] sm:$0xff]
      %v2037 = vld [vmem:[%s2013 + $0xb8] sm:$0xff]
      %v2038 = vld [vmem:[%s2013 + $0xc0] sm:$0xff]
      %v2039 = vld [vmem:[%s2013 + $0xc8] sm:$0xff]
      %v2040 = vld [vmem:[%s2013 + $0xd0] sm:$0xff]
      %v2041 = vld [vmem:[%s2013 + $0xd8] sm:$0xff]
      %v2042 = vrot.slane %v1832, 2
      %v2043 = vrot.slane %v1834, 2
      %v2044 = vsel %vm731, %v2042, %v2043
      %v2045 = vrot.slane %v1833, 2
      %v2046 = vrot.slane %v1835, 2
      %v2047 = vsel %vm731, %v2045, %v2046
      %v2048 = vrot.slane %v1836, 2
      %v2049 = vsel %vm731, %v2043, %v2048
      %v2050 = vrot.slane %v1837, 2
      %v2051 = vsel %vm731, %v2046, %v2050
      %v2054 = vsel %vm872, %v2047, 0
      %v2056 = vsel %vm872, %v2051, 0
      %2058 = vmatpush.msra.mxu0 %v2029
      %2059 = vmatpush.msra.mxu0 %v2028
      %2060 = vmatpush.msra.mxu0 %v2027
      %2061 = vmatpush.msra.mxu0 %v2026
      %2062 = vmatpush.msra.mxu0 %v2025
      %2063 = vmatpush.msra.mxu0 %v2024
      %2064 = vmatpush.msra.mxu0 %v2023
      %2065 = vmatpush.msra.mxu0 %v2022
      %2066 = vmatpush.msra.mxu0 %v2021
      %2067 = vmatpush.msra.mxu0 %v2020
      %2068 = vmatpush.msra.mxu0 %v2019
      %2069 = vmatpush.msra.mxu0 %v2018
      %2070 = vmatpush.msra.mxu0 %v2017
      %2071 = vmatpush.msra.mxu0 %v2016
      %2072 = vmatpush.msra.mxu0 %v2015
      %2073 = vmatpush.msra.mxu0 %v2014
      %2074 = vmatmul.f32.gmra.mxu0 %v2044
      %v2075 = vpop.f32.mrf.mxu0
      %v2076 = vadd.f32 0.0, %v2075
      %2077 = vmatmul.f32.gmra.mxu0 %v2049
      %v2078 = vpop.f32.mrf.mxu0
      %v2079 = vadd.f32 0.0, %v2078
      %2080 = vdwg.mxu0
      %2081 = vmatpush.msra.mxu0 0.0
      %2082 = vmatpush.msra.mxu0 0.0
      %2083 = vmatpush.msra.mxu0 0.0
      %2084 = vmatpush.msra.mxu0 0.0
      %2085 = vmatpush.msra.mxu0 %v2041
      %2086 = vmatpush.msra.mxu0 %v2040
      %2087 = vmatpush.msra.mxu0 %v2039
      %2088 = vmatpush.msra.mxu0 %v2038
      %2089 = vmatpush.msra.mxu0 %v2037
      %2090 = vmatpush.msra.mxu0 %v2036
      %2091 = vmatpush.msra.mxu0 %v2035
      %2092 = vmatpush.msra.mxu0 %v2034
      %2093 = vmatpush.msra.mxu0 %v2033
      %2094 = vmatpush.msra.mxu0 %v2032
      %2095 = vmatpush.msra.mxu0 %v2031
      %2096 = vmatpush.msra.mxu0 %v2030
      %2097 = vmatmul.f32.gmra.mxu0 %v2054
      %v2098 = vpop.f32.mrf.mxu0
      %v2099 = vadd.f32 %v2076, %v2098
      %2100 = vmatmul.f32.gmra.mxu0 %v2056
      %v2101 = vpop.f32.mrf.mxu0
      %v2102 = vadd.f32 %v2079, %v2101
      %2103 = vdwg.mxu0
      %v2104 = vadd.f32 %v2008, %v2099
      %v2105 = vadd.f32 %v2011, %v2102
      %v2106 = vld [vmem:[%s15] sm:$0x1]
      %v2108 = vperm.slane %v2106, 0
      %v2110 = vadd.f32 %v2104, %v2108
      %v2111 = vadd.f32 %v2105, %v2108
      %v2112 = vxor.u32 %v2110, 2147483648
      %v2113 = vxor.u32 %v2111, 2147483648
      %v2114 = vmul.f32 %v2112, 1.442695
      %v2115 = vpow.pop %v2114
      %v2116 = vmul.f32 %v2113, 1.442695
      %v2117 = vpow.pop %v2116
      %v2118 = vadd.f32 %v2115, 1.0
      %v2119 = vadd.f32 %v2117, 1.0
      %v2120 = vrcp.pop %v2118
      %v2121 = vmul.f32 %v2118, %v2120
      %v2122 = vsub.f32 1.0, %v2121
      %v2123 = vmul.f32 %v2120, %v2122
      %v2124 = vadd.f32 %v2120, %v2123
      %vm2125 = vweird.f32 %v2118
      %vm2126 = vweird.f32 %v2120
      %vm2127 = vmor %vm2125, %vm2126
      %v2128 = vsel %vm2127, %v2120, %v2124
      %v2129 = vand.u32 2147483647, %v2118
      %vm2130 = vcmp.eq.f32.partialorder %v2129, 8.507059e+37
      %v2131 = vand.u32 %v2118, 2147483648
      %v2132 = vor.u32 1.1754944e-38, %v2131
      %v2133 = vsel %vm2130, %v2132, %v2128
      %v2134 = vmul.f32 1.0, %v2133
      %v2135 = vrcp.pop %v2119
      %v2136 = vmul.f32 %v2119, %v2135
      %v2137 = vsub.f32 1.0, %v2136
      %v2138 = vmul.f32 %v2135, %v2137
      %v2139 = vadd.f32 %v2135, %v2138
      %vm2140 = vweird.f32 %v2119
      %vm2141 = vweird.f32 %v2135
      %vm2142 = vmor %vm2140, %vm2141
      %v2143 = vsel %vm2142, %v2135, %v2139
      %v2144 = vand.u32 2147483647, %v2119
      %vm2145 = vcmp.eq.f32.partialorder %v2144, 8.507059e+37
      %v2146 = vand.u32 %v2119, 2147483648
      %v2147 = vor.u32 1.1754944e-38, %v2146
      %v2148 = vsel %vm2145, %v2147, %v2143
      %v2149 = vmul.f32 1.0, %v2148
      %2150 = vst.msk [vmem:[%s568] sm:$0xff] %vm613, %v2134
      %2151 = vst.msk [vmem:[%s568 + $0x8] sm:$0xff] %vm613, %v2149
      %p2152 = scmp.lt.s32.totalorder %s29, 1
      %s2153 = scalar_select %p2152, %s29, 1
      %s2154 = smul.addr %s2153, 2
      %s2155 = smul.addr %s2154, 8
      %s2156 = scalar_lea.vmem %s16, %s2155
      %p2157 = scmp.lt.s32.totalorder %s29, 1
      %s2158 = scalar_select %p2157, %s29, 1
      %s2159 = scalar_lea.vmem %s17, %s2158
      // Predicated region
      $region85: #{toad_level_vae_forward.1} parent=83 // pred_check
        %p2160 = pneg %p393
      $region86: #{toad_level_vae_forward.1} parent=83 // pred_check_branch
        %2162 = sbr.rel (%p2160) target = $region88
      $region87: #{toad_level_vae_forward.1} parent=83 // pred_region
        _
      $region88: #{toad_level_vae_forward.1} parent=83 // pred_fallthru
        _
      // Predicated region
      $region89: #{toad_level_vae_forward.1} parent=83 // pred_check
        %p2163 = pneg %p419
      $region90: #{toad_level_vae_forward.1} parent=83 // pred_check_branch
        %2165 = sbr.rel (%p2163) target = $region92
      $region91: #{toad_level_vae_forward.1} parent=83 // pred_region
        _
      $region92: #{toad_level_vae_forward.1} parent=83 // pred_fallthru
        _
    $region84: #{toad_level_vae_forward.1} parent=5 // pred_fallthru
      _
    %p2166 = scmp.le.s32.totalorder 2, %s24
    // Predicated region
    $region93: #{toad_level_vae_forward.1} parent=5 // pred_check
      %p2167 = pneg %p2166
    $region94: #{toad_level_vae_forward.1} parent=5 // pred_check_branch
      %2169 = sbr.rel (%p2167) target = $region96
    $region95: #{toad_level_vae_forward.1} parent=5 // pred_region
      %s2170 = ssub.s32 %s24, 2
      // Predicated region
      $region97: #{toad_level_vae_forward.1} parent=95 // pred_check
        %p2171 = pneg %p399
      $region98: #{toad_level_vae_forward.1} parent=95 // pred_check_branch
        %2173 = sbr.rel (%p2171) target = $region100
      $region99: #{toad_level_vae_forward.1} parent=95 // pred_region
        %p2174 = scmp.lt.s32.totalorder %s30, 1
        %s2175 = scalar_select %p2174, %s30, 1
        %s2176 = smul.addr %s2175, 2
        %s2177 = smul.addr %s2176, 8
        %s2178 = scalar_lea.vmem %s16, %s2177
      $region100: #{toad_level_vae_forward.1} parent=95 // pred_fallthru
        _
      // Predicated region
      $region101: #{toad_level_vae_forward.1} parent=95 // pred_check
        %p2179 = pneg %p425
      $region102: #{toad_level_vae_forward.1} parent=95 // pred_check_branch
        %2181 = sbr.rel (%p2179) target = $region104
      $region103: #{toad_level_vae_forward.1} parent=95 // pred_region
        %p2182 = scmp.lt.s32.totalorder %s30, 1
        %s2183 = scalar_select %p2182, %s30, 1
        %s2184 = scalar_lea.vmem %s17, %s2183
      $region104: #{toad_level_vae_forward.1} parent=95 // pred_fallthru
        _
    $region96: #{toad_level_vae_forward.1} parent=5 // pred_fallthru
      _
  $region6: #{toad_level_vae_forward.1} parent=0 // loop_footer
    %s28 = sadd.s32 1, %s24
  $region7: #{toad_level_vae_forward.1} parent=0 // loop_footer_branch
    %23 = sbr.rel target = $region3
  $region8: #{toad_level_vae_forward.1} parent=0 // loop_exit
    _

</llo_original>
